<compile_context>
chip_gen: v7x
topology: tpu7x:2x2x1
jax: 0.10.0
libtpu: 0.0.40
codegen_flags: <defaults>
</compile_context>

<pallas_src>
import functools

import jax
import jax.numpy as jnp
from jax.experimental import pallas as pl
from jax.experimental.pallas import tpu as pltpu


def _window_taps(a, W):
    """Gather the 4 taps of a 2x2 window for a row-major (R, C) flat map.

    Returns (R, 4*C) holding channels of a[p], a[p+1], a[p+W], a[p+W+1]
    (tap order (0,0),(0,1),(1,0),(1,1)).  pltpu.roll(a, R-k, axis=0) is the
    XLU-native equivalent of jnp.roll(a, -k, axis=0).  Wrap-around rows only
    land at positions with h == H-1 or w == W-1 (including across stacked
    image boundaries), which are outside the valid output window and are
    discarded by the wrapper slice.
    """
    R = a.shape[0]
    r01 = pltpu.roll(a, R - 1, axis=0)       # a[p+1]
    r10 = pltpu.roll(a, R - W, axis=0)       # a[p+W]
    r11 = pltpu.roll(r10, R - 1, axis=0)     # a[p+W+1] (reuse r10: one fewer
    #                                          multi-vreg rotation per stage)
    return jnp.concatenate([a, r01, r10, r11], axis=-1)


def _dwsc_kernel(x_ref, w1_ref, w2_ref, fb_ref, o_ref, *, W):
    # x_ref : (R, Cin)          R = images_per_block * H * W, row-major flat
    # w1_ref: (4*Cin, Cin)      depthwise 2x2 folded into pointwise 1x1
    # w2_ref: (4*Cin, COUT_PAD) final 2x2 conv weight, lane-padded out-ch
    # fb_ref: (1, COUT_PAD)     lane-padded bias
    # o_ref : (R, COUT_PAD)     lane-dense output slab
    x = x_ref[...]

    # Stage 1: depthwise(2x2) + pointwise(1x1) as one MXU matmul, then ReLU.
    y = jnp.dot(_window_taps(x, W), w1_ref[...],
                preferred_element_type=jnp.float32)            # (R, Cin)
    y = jnp.maximum(y, 0.0)

    # Stage 2: final 2x2 conv (Cin -> Cout) as one MXU matmul, bias once.
    out = jnp.dot(_window_taps(y, W), w2_ref[...],
                  preferred_element_type=jnp.float32)          # (R, COUT_PAD)
    o_ref[...] = (out + fb_ref[...]).astype(o_ref.dtype)


def _fuse_weights(dw, pw, fw, fb, cout_pad):
    """Precompute the fused / lane-padded weights (done once, outside kernel)."""
    Cin = pw.shape[0]
    Cout = fw.shape[-1]
    # Depthwise folded into pointwise, tap-major rows: (4*Cin, Cin).
    w1 = jnp.concatenate([dw[0, 0][:, None] * pw,
                          dw[0, 1][:, None] * pw,
                          dw[1, 0][:, None] * pw,
                          dw[1, 1][:, None] * pw], axis=0)
    # Final 2x2 conv as a (4*Cin, Cout) matmul, padded to lane-dense COUT_PAD.
    w2 = fw.reshape(4 * Cin, Cout)
    w2p = jnp.zeros((4 * Cin, cout_pad), w2.dtype).at[:, :Cout].set(w2)
    fbp = jnp.zeros((1, cout_pad), fb.dtype).at[0, :Cout].set(fb)
    return w1, w2p, fbp


def _num_grid_blocks(N):
    """Grid sizing: fully collapsed (1 step) on single-TC parts (v5e/v6e);
    2 whole-image 'parallel' blocks on dual-TensorCore v7x."""
    try:
        kind = jax.devices()[0].device_kind.lower()
    except Exception:
        kind = ""
    if "v7" in kind and N >= 2 and N % 2 == 0:
        return 2
    return 1


def last_conv_dwsc_nhwc(x_nhwc, dw, pw, fw, fb):
    """NHWC API: (N, H, W, Cin) -> (N, H-2, W-2, Cout)."""
    N, H, W, Cin = x_nhwc.shape
    Cout = fw.shape[-1]
    Ho, Wo = H - 2, W - 2
    HW = H * W
    cout_pad = ((Cout + 127) // 128) * 128       # lane-dense output channels

    blocks = _num_grid_blocks(N)
    rows_per_block = (N // blocks) * HW
    assert rows_per_block % 8 == 0, "block row count must be sublane-aligned"

    w1, w2p, fbp = _fuse_weights(dw, pw, fw, fb, cout_pad)
    x_flat = x_nhwc.reshape(N * HW, Cin)         # whole batch on the sublanes
    out_dtype = x_nhwc.dtype

    itemsize = jnp.dtype(out_dtype).itemsize
    flops = 2 * N * HW * (4 * Cin) * (Cin + cout_pad)
    bytes_accessed = int(
        (x_flat.size + w1.size + w2p.size + fbp.size + N * HW * cout_pad)
        * itemsize)

    kernel = functools.partial(_dwsc_kernel, W=W)
    out = pl.pallas_call(
        kernel,
        out_shape=jax.ShapeDtypeStruct((N * HW, cout_pad), out_dtype),
        grid_spec=pltpu.PrefetchScalarGridSpec(
            num_scalar_prefetch=0,
            grid=(blocks,),
            in_specs=[
                pl.BlockSpec((rows_per_block, Cin), lambda b: (b, 0)),
                pl.BlockSpec((4 * Cin, Cin), lambda b: (0, 0)),
                pl.BlockSpec((4 * Cin, cout_pad), lambda b: (0, 0)),
                pl.BlockSpec((1, cout_pad), lambda b: (0, 0)),
            ],
            out_specs=pl.BlockSpec((rows_per_block, cout_pad),
                                   lambda b: (b, 0)),
        ),
        compiler_params=pltpu.CompilerParams(
            dimension_semantics=("parallel",)),
        cost_estimate=pl.CostEstimate(flops=flops, transcendentals=0,
                                      bytes_accessed=bytes_accessed),
    )(x_flat, w1, w2p, fbp)

    # Layout plumbing outside the kernel (a real NHWC consumer would read the
    # padded (N*HW, 128) slab directly): drop lane padding + invalid border.
    # TODO(synk): expose the padded flat slab to fused consumers to avoid this
    # strided slice when embedded in a larger pipeline.
    return out.reshape(N, H, W, cout_pad)[:, :Ho, :Wo, :Cout]


def last_conv_dwsc(x_nchw, dw, pw, fw, fb):
    """NCHW compatibility shim matching the PyTorch module contract.

    The kernel itself is NHWC/lane-dense; in a real pipeline the producer
    would emit NHWC and these transposes disappear.
    """
    x_nhwc = jnp.transpose(x_nchw, (0, 2, 3, 1))
    out_nhwc = last_conv_dwsc_nhwc(x_nhwc, dw, pw, fw, fb)
    return jnp.transpose(out_nhwc, (0, 3, 1, 2))


def _reference(x_nchw, dw, pw, fw, fb):
    """Pure-JAX NCHW reference mirroring the PyTorch module."""
    N, Cin, H, W = x_nchw.shape
    dn = ("NCHW", "OIHW", "NCHW")
    # depthwise: OIHW weight (Cin, 1, 2, 2), feature_group_count=Cin
    w_dw = jnp.transpose(dw, (2, 0, 1))[:, None, :, :]
    y = jax.lax.conv_general_dilated(x_nchw, w_dw, (1, 1), "VALID",
                                     dimension_numbers=dn,
                                     feature_group_count=Cin)
    # pointwise: OIHW weight (Cin, Cin, 1, 1); pw is [c_in, c_out]
    w_pw = jnp.transpose(pw, (1, 0))[:, :, None, None]
    y = jax.lax.conv_general_dilated(y, w_pw, (1, 1), "VALID",
                                     dimension_numbers=dn)
    y = jnp.maximum(y, 0.0)
    # final 2x2: fw is (2,2,Cin,Cout) -> OIHW (Cout,Cin,2,2)
    w_f = jnp.transpose(fw, (3, 2, 0, 1))
    y = jax.lax.conv_general_dilated(y, w_f, (1, 1), "VALID",
                                     dimension_numbers=dn)
    return y + fb[None, :, None, None]


if __name__ == "__main__":
    N, Cin, Cout, H, W = 2, 4, 8, 16, 16

    key = jax.random.PRNGKey(0)
    kx, k1, k2, k3, k4 = jax.random.split(key, 5)

    x = jax.random.normal(kx, (N, Cin, H, W), dtype=jnp.float32)
    dw = jax.random.normal(k1, (2, 2, Cin), dtype=jnp.float32) * 0.5   # depthwise
    pw = jax.random.normal(k2, (Cin, Cin), dtype=jnp.float32) * 0.5    # pointwise [ci, co]
    fw = jax.random.normal(k3, (2, 2, Cin, Cout), dtype=jnp.float32) * 0.5
    fb = jax.random.normal(k4, (Cout,), dtype=jnp.float32) * 0.1

    out = jax.block_until_ready(jax.jit(last_conv_dwsc)(x, dw, pw, fw, fb))
    ref = jax.block_until_ready(_reference(x, dw, pw, fw, fb))

    assert out.shape == (N, Cout, H - 2, W - 2), out.shape
    assert jnp.allclose(out, ref, atol=1e-4, rtol=1e-3), "mismatch vs reference"

    print("KERNEL_OK")
</pallas_src>

<mosaic_0001>
module attributes {stable_mosaic.version = 11 : i64} {
  func.func @_dwsc_kernel(%arg0: i32, %arg1: memref<512x4xf32, #tpu.memory_space<vmem>>, %arg2: memref<16x4xf32, #tpu.memory_space<vmem>>, %arg3: memref<16x128xf32, #tpu.memory_space<vmem>>, %arg4: memref<1x128xf32, #tpu.memory_space<vmem>>, %arg5: memref<512x128xf32, #tpu.memory_space<vmem>>) attributes {dimension_semantics = [#tpu.dimension_semantics<parallel>], iteration_bounds = array<i64: 1>, scalar_prefetch = 0 : i64, scratch_operands = 0 : i64, tpu.core_type = #tpu.core_type<tc>, window_params = [{transform_indices = @transform_0, window_bounds = array<i64: 512, 4>}, {pipeline_mode = #tpu.pipeline_mode<synchronous>, transform_indices = @transform_1, window_bounds = array<i64: 16, 4>}, {pipeline_mode = #tpu.pipeline_mode<synchronous>, transform_indices = @transform_2, window_bounds = array<i64: 16, 128>}, {pipeline_mode = #tpu.pipeline_mode<synchronous>, transform_indices = @transform_3, window_bounds = array<i64: 1, 128>}, {transform_indices = @transform_4, window_bounds = array<i64: 512, 128>}]} {
    %c0 = arith.constant 0 : index
    %c0_0 = arith.constant 0 : index
    %0 = vector.load %arg1[%c0, %c0_0] : memref<512x4xf32, #tpu.memory_space<vmem>>, vector<512x4xf32>
    %c511_i32 = arith.constant 511 : i32
    %1 = tpu.dynamic_rotate %0 by %c511_i32 dim 0 : vector<512x4xf32>, i32 -> vector<512x4xf32>
    %c496_i32 = arith.constant 496 : i32
    %2 = tpu.dynamic_rotate %0 by %c496_i32 dim 0 : vector<512x4xf32>, i32 -> vector<512x4xf32>
    %c511_i32_1 = arith.constant 511 : i32
    %3 = tpu.dynamic_rotate %2 by %c511_i32_1 dim 0 : vector<512x4xf32>, i32 -> vector<512x4xf32>
    %4 = tpu.concatenate %0, %1, %2, %3 in 1 : vector<512x4xf32>, vector<512x4xf32>, vector<512x4xf32>, vector<512x4xf32> -> vector<512x16xf32>
    %c0_2 = arith.constant 0 : index
    %c0_3 = arith.constant 0 : index
    %5 = vector.load %arg2[%c0_2, %c0_3] : memref<16x4xf32, #tpu.memory_space<vmem>>, vector<16x4xf32>
    %cst = arith.constant dense<0.000000e+00> : vector<512x4xf32>
    %6 = tpu.matmul %4, %5, %cst {dimension_numbers = #tpu.dot_dimension_numbers<[1], [0], [0], [1], [0, 0, 1, 1], [], []>} : vector<512x16xf32>, vector<16x4xf32>, vector<512x4xf32> -> vector<512x4xf32>
    %cst_4 = arith.constant 0.000000e+00 : f32
    %7 = vector.broadcast %cst_4 : f32 to vector<512x4xf32>
    %8 = arith.maximumf %6, %7 : vector<512x4xf32>
    %c511_i32_5 = arith.constant 511 : i32
    %9 = tpu.dynamic_rotate %8 by %c511_i32_5 dim 0 : vector<512x4xf32>, i32 -> vector<512x4xf32>
    %c496_i32_6 = arith.constant 496 : i32
    %10 = tpu.dynamic_rotate %8 by %c496_i32_6 dim 0 : vector<512x4xf32>, i32 -> vector<512x4xf32>
    %c511_i32_7 = arith.constant 511 : i32
    %11 = tpu.dynamic_rotate %10 by %c511_i32_7 dim 0 : vector<512x4xf32>, i32 -> vector<512x4xf32>
    %12 = tpu.concatenate %8, %9, %10, %11 in 1 : vector<512x4xf32>, vector<512x4xf32>, vector<512x4xf32>, vector<512x4xf32> -> vector<512x16xf32>
    %c0_8 = arith.constant 0 : index
    %c0_9 = arith.constant 0 : index
    %13 = vector.load %arg3[%c0_8, %c0_9] : memref<16x128xf32, #tpu.memory_space<vmem>>, vector<16x128xf32>
    %cst_10 = arith.constant dense<0.000000e+00> : vector<512x128xf32>
    %14 = tpu.matmul %12, %13, %cst_10 {dimension_numbers = #tpu.dot_dimension_numbers<[1], [0], [0], [1], [0, 0, 1, 1], [], []>} : vector<512x16xf32>, vector<16x128xf32>, vector<512x128xf32> -> vector<512x128xf32>
    %c0_11 = arith.constant 0 : index
    %c0_12 = arith.constant 0 : index
    %15 = vector.load %arg4[%c0_11, %c0_12] : memref<1x128xf32, #tpu.memory_space<vmem>>, vector<1x128xf32>
    %16 = vector.broadcast %15 : vector<1x128xf32> to vector<512x128xf32>
    %17 = arith.addf %14, %16 : vector<512x128xf32>
    %c0_13 = arith.constant 0 : index
    %c0_14 = arith.constant 0 : index
    %18 = vector.load %arg5[%c0_13, %c0_14] : memref<512x128xf32, #tpu.memory_space<vmem>>, vector<512x128xf32>
    tpu.vector_store %arg5[%c0_13, %c0_14], %17 {strides = array<i32>} : memref<512x128xf32, #tpu.memory_space<vmem>>, vector<512x128xf32>,
    return
  }
  func.func @transform_0(%arg0: i32) -> (i32, i32) {
    %c0_i32 = arith.constant 0 : i32
    %c0_i32_0 = arith.constant 0 : i32
    return %arg0, %c0_i32 : i32, i32
  }
  func.func @transform_1(%arg0: i32) -> (i32, i32) {
    %c0_i32 = arith.constant 0 : i32
    %c0_i32_0 = arith.constant 0 : i32
    %c0_i32_1 = arith.constant 0 : i32
    return %c0_i32, %c0_i32_0 : i32, i32
  }
  func.func @transform_2(%arg0: i32) -> (i32, i32) {
    %c0_i32 = arith.constant 0 : i32
    %c0_i32_0 = arith.constant 0 : i32
    %c0_i32_1 = arith.constant 0 : i32
    return %c0_i32, %c0_i32_0 : i32, i32
  }
  func.func @transform_3(%arg0: i32) -> (i32, i32) {
    %c0_i32 = arith.constant 0 : i32
    %c0_i32_0 = arith.constant 0 : i32
    %c0_i32_1 = arith.constant 0 : i32
    return %c0_i32, %c0_i32_0 : i32, i32
  }
  func.func @transform_4(%arg0: i32) -> (i32, i32) {
    %c0_i32 = arith.constant 0 : i32
    %c0_i32_0 = arith.constant 0 : i32
    return %arg0, %c0_i32 : i32, i32
  }
}

</mosaic_0001>

<llo_original>
// kernel: last_conv_dwsc.1
$region0: #{last_conv_dwsc.1}
  #allocation0 [shape = 'u32[]', space=smem, size = 0x4, offset = 0x4, fixed_abs, tag = 'smem constant byte address 0x4 - core index']
  #allocation1 [shape = 'u32[144,128]{1,0:T(1,128)}', space=vmem, size = 0x12000, scoped, tag = 'internal scratch']
  %s0 = inlined_call_operand.vmem [shape: f32[512,4], index: 0, kind: input, shape index: {}]
  %s1 = inlined_call_operand.vmem [shape: f32[16,4], index: 1, kind: input, shape index: {}]
  %s2 = inlined_call_operand.vmem [shape: f32[16,128], index: 2, kind: input, shape index: {}]
  %s3 = inlined_call_operand.vmem [shape: f32[1,128], index: 3, kind: input, shape index: {}]
  %s4 = inlined_call_operand.vmem [shape: f32[512,128], index: 4, kind: output, shape index: {}]
  %s5 = sld [smem:[#allocation0]]
  $region26: #{last_conv_dwsc.1} parent=0
    _
  %s7 = ssub.s32 1, %s5
  %s8 = scalar_select 0, %s7, %s5
  // Predicated region
  $region2: #{last_conv_dwsc.1} parent=0 // pred_check
    _
  $region3: #{last_conv_dwsc.1} parent=0 // pred_check_branch
    %10 = sbr.rel (0) target = $region5
  $region4: #{last_conv_dwsc.1} parent=0 // pred_region
    _
  $region5: #{last_conv_dwsc.1} parent=0 // pred_fallthru
    _
  // Predicated region
  $region6: #{last_conv_dwsc.1} parent=0 // pred_check
    _
  $region7: #{last_conv_dwsc.1} parent=0 // pred_check_branch
    %12 = sbr.rel (0) target = $region9
  $region8: #{last_conv_dwsc.1} parent=0 // pred_region
    _
  $region9: #{last_conv_dwsc.1} parent=0 // pred_fallthru
    _
  // Predicated region
  $region10: #{last_conv_dwsc.1} parent=0 // pred_check
    _
  $region11: #{last_conv_dwsc.1} parent=0 // pred_check_branch
    %14 = sbr.rel (0) target = $region13
  $region12: #{last_conv_dwsc.1} parent=0 // pred_region
    _
  $region13: #{last_conv_dwsc.1} parent=0 // pred_fallthru
    _
  // Predicated region
  $region14: #{last_conv_dwsc.1} parent=0 // pred_check
    _
  $region15: #{last_conv_dwsc.1} parent=0 // pred_check_branch
    %16 = sbr.rel (0) target = $region17
  $region16: #{last_conv_dwsc.1} parent=0 // pred_region
    _
  $region17: #{last_conv_dwsc.1} parent=0 // pred_fallthru
    _
  %v17 = vld [vmem:[%s0] sm:$0xff]
  %v18 = vld [vmem:[%s0 + $0x8] sm:$0xff]
  %v19 = vld [vmem:[%s0 + $0x10] sm:$0xff]
  %v20 = vld [vmem:[%s0 + $0x18] sm:$0xff]
  %v21 = vld [vmem:[%s0 + $0x20] sm:$0xff]
  %v22 = vld [vmem:[%s0 + $0x28] sm:$0xff]
  %v23 = vld [vmem:[%s0 + $0x30] sm:$0xff]
  %v24 = vld [vmem:[%s0 + $0x38] sm:$0xff]
  %v25 = vld [vmem:[%s0 + $0x40] sm:$0xff]
  %v26 = vld [vmem:[%s0 + $0x48] sm:$0xff]
  %v27 = vld [vmem:[%s0 + $0x50] sm:$0xff]
  %v28 = vld [vmem:[%s0 + $0x58] sm:$0xff]
  %v29 = vld [vmem:[%s0 + $0x60] sm:$0xff]
  %v30 = vld [vmem:[%s0 + $0x68] sm:$0xff]
  %v31 = vld [vmem:[%s0 + $0x70] sm:$0xff]
  %v32 = vld [vmem:[%s0 + $0x78] sm:$0xff]
  %v33 = vld [vmem:[%s0 + $0x80] sm:$0xff]
  %v34 = vld [vmem:[%s0 + $0x88] sm:$0xff]
  %v35 = vld [vmem:[%s0 + $0x90] sm:$0xff]
  %v36 = vld [vmem:[%s0 + $0x98] sm:$0xff]
  %v37 = vld [vmem:[%s0 + $0xa0] sm:$0xff]
  %v38 = vld [vmem:[%s0 + $0xa8] sm:$0xff]
  %v39 = vld [vmem:[%s0 + $0xb0] sm:$0xff]
  %v40 = vld [vmem:[%s0 + $0xb8] sm:$0xff]
  %v41 = vld [vmem:[%s0 + $0xc0] sm:$0xff]
  %v42 = vld [vmem:[%s0 + $0xc8] sm:$0xff]
  %v43 = vld [vmem:[%s0 + $0xd0] sm:$0xff]
  %v44 = vld [vmem:[%s0 + $0xd8] sm:$0xff]
  %v45 = vld [vmem:[%s0 + $0xe0] sm:$0xff]
  %v46 = vld [vmem:[%s0 + $0xe8] sm:$0xff]
  %v47 = vld [vmem:[%s0 + $0xf0] sm:$0xff]
  %v48 = vld [vmem:[%s0 + $0xf8] sm:$0xff]
  %v49 = vld [vmem:[%s0 + $0x100] sm:$0xff]
  %v50 = vld [vmem:[%s0 + $0x108] sm:$0xff]
  %v51 = vld [vmem:[%s0 + $0x110] sm:$0xff]
  %v52 = vld [vmem:[%s0 + $0x118] sm:$0xff]
  %v53 = vld [vmem:[%s0 + $0x120] sm:$0xff]
  %v54 = vld [vmem:[%s0 + $0x128] sm:$0xff]
  %v55 = vld [vmem:[%s0 + $0x130] sm:$0xff]
  %v56 = vld [vmem:[%s0 + $0x138] sm:$0xff]
  %v57 = vld [vmem:[%s0 + $0x140] sm:$0xff]
  %v58 = vld [vmem:[%s0 + $0x148] sm:$0xff]
  %v59 = vld [vmem:[%s0 + $0x150] sm:$0xff]
  %v60 = vld [vmem:[%s0 + $0x158] sm:$0xff]
  %v61 = vld [vmem:[%s0 + $0x160] sm:$0xff]
  %v62 = vld [vmem:[%s0 + $0x168] sm:$0xff]
  %v63 = vld [vmem:[%s0 + $0x170] sm:$0xff]
  %v64 = vld [vmem:[%s0 + $0x178] sm:$0xff]
  %v65 = vld [vmem:[%s0 + $0x180] sm:$0xff]
  %v66 = vld [vmem:[%s0 + $0x188] sm:$0xff]
  %v67 = vld [vmem:[%s0 + $0x190] sm:$0xff]
  %v68 = vld [vmem:[%s0 + $0x198] sm:$0xff]
  %v69 = vld [vmem:[%s0 + $0x1a0] sm:$0xff]
  %v70 = vld [vmem:[%s0 + $0x1a8] sm:$0xff]
  %v71 = vld [vmem:[%s0 + $0x1b0] sm:$0xff]
  %v72 = vld [vmem:[%s0 + $0x1b8] sm:$0xff]
  %v73 = vld [vmem:[%s0 + $0x1c0] sm:$0xff]
  %v74 = vld [vmem:[%s0 + $0x1c8] sm:$0xff]
  %v75 = vld [vmem:[%s0 + $0x1d0] sm:$0xff]
  %v76 = vld [vmem:[%s0 + $0x1d8] sm:$0xff]
  %v77 = vld [vmem:[%s0 + $0x1e0] sm:$0xff]
  %v78 = vld [vmem:[%s0 + $0x1e8] sm:$0xff]
  %v79 = vld [vmem:[%s0 + $0x1f0] sm:$0xff]
  %v80 = vld [vmem:[%s0 + $0x1f8] sm:$0xff]
  %v81 = vrot.slane %v17, 1
  %v82 = vrot.slane %v18, 1
  %v83 = vrot.slane %v19, 1
  %v84 = vrot.slane %v20, 1
  %v85 = vrot.slane %v21, 1
  %v86 = vrot.slane %v22, 1
  %v87 = vrot.slane %v23, 1
  %v88 = vrot.slane %v24, 1
  %v89 = vrot.slane %v25, 1
  %v90 = vrot.slane %v26, 1
  %v91 = vrot.slane %v27, 1
  %v92 = vrot.slane %v28, 1
  %v93 = vrot.slane %v29, 1
  %v94 = vrot.slane %v30, 1
  %v95 = vrot.slane %v31, 1
  %v96 = vrot.slane %v32, 1
  %v97 = vrot.slane %v33, 1
  %v98 = vrot.slane %v34, 1
  %v99 = vrot.slane %v35, 1
  %v100 = vrot.slane %v36, 1
  %v101 = vrot.slane %v37, 1
  %v102 = vrot.slane %v38, 1
  %v103 = vrot.slane %v39, 1
  %v104 = vrot.slane %v40, 1
  %v105 = vrot.slane %v41, 1
  %v106 = vrot.slane %v42, 1
  %v107 = vrot.slane %v43, 1
  %v108 = vrot.slane %v44, 1
  %v109 = vrot.slane %v45, 1
  %v110 = vrot.slane %v46, 1
  %v111 = vrot.slane %v47, 1
  %v112 = vrot.slane %v48, 1
  %v113 = vrot.slane %v49, 1
  %v114 = vrot.slane %v50, 1
  %v115 = vrot.slane %v51, 1
  %v116 = vrot.slane %v52, 1
  %v117 = vrot.slane %v53, 1
  %v118 = vrot.slane %v54, 1
  %v119 = vrot.slane %v55, 1
  %v120 = vrot.slane %v56, 1
  %v121 = vrot.slane %v57, 1
  %v122 = vrot.slane %v58, 1
  %v123 = vrot.slane %v59, 1
  %v124 = vrot.slane %v60, 1
  %v125 = vrot.slane %v61, 1
  %v126 = vrot.slane %v62, 1
  %v127 = vrot.slane %v63, 1
  %v128 = vrot.slane %v64, 1
  %v129 = vrot.slane %v65, 1
  %v130 = vrot.slane %v66, 1
  %v131 = vrot.slane %v67, 1
  %v132 = vrot.slane %v68, 1
  %v133 = vrot.slane %v69, 1
  %v134 = vrot.slane %v70, 1
  %v135 = vrot.slane %v71, 1
  %v136 = vrot.slane %v72, 1
  %v137 = vrot.slane %v73, 1
  %v138 = vrot.slane %v74, 1
  %v139 = vrot.slane %v75, 1
  %v140 = vrot.slane %v76, 1
  %v141 = vrot.slane %v77, 1
  %v142 = vrot.slane %v78, 1
  %v143 = vrot.slane %v79, 1
  %v144 = vrot.slane %v80, 1
  %v145 = vlaneseq
  %v146 = vshrl.u32 %v145, 7
  %vm147 = vcmp.lt.s32.totalorder %v146, 7
  %v148 = vsel %vm147, %v143, %v144
  %v149 = vsel %vm147, %v142, %v143
  %v150 = vsel %vm147, %v141, %v142
  %v151 = vsel %vm147, %v140, %v141
  %v152 = vsel %vm147, %v139, %v140
  %v153 = vsel %vm147, %v138, %v139
  %v154 = vsel %vm147, %v137, %v138
  %v155 = vsel %vm147, %v136, %v137
  %v156 = vsel %vm147, %v135, %v136
  %v157 = vsel %vm147, %v134, %v135
  %v158 = vsel %vm147, %v133, %v134
  %v159 = vsel %vm147, %v132, %v133
  %v160 = vsel %vm147, %v131, %v132
  %v161 = vsel %vm147, %v130, %v131
  %v162 = vsel %vm147, %v129, %v130
  %v163 = vsel %vm147, %v128, %v129
  %v164 = vsel %vm147, %v127, %v128
  %v165 = vsel %vm147, %v126, %v127
  %v166 = vsel %vm147, %v125, %v126
  %v167 = vsel %vm147, %v124, %v125
  %v168 = vsel %vm147, %v123, %v124
  %v169 = vsel %vm147, %v122, %v123
  %v170 = vsel %vm147, %v121, %v122
  %v171 = vsel %vm147, %v120, %v121
  %v172 = vsel %vm147, %v119, %v120
  %v173 = vsel %vm147, %v118, %v119
  %v174 = vsel %vm147, %v117, %v118
  %v175 = vsel %vm147, %v116, %v117
  %v176 = vsel %vm147, %v115, %v116
  %v177 = vsel %vm147, %v114, %v115
  %v178 = vsel %vm147, %v113, %v114
  %v179 = vsel %vm147, %v112, %v113
  %v180 = vsel %vm147, %v111, %v112
  %v181 = vsel %vm147, %v110, %v111
  %v182 = vsel %vm147, %v109, %v110
  %v183 = vsel %vm147, %v108, %v109
  %v184 = vsel %vm147, %v107, %v108
  %v185 = vsel %vm147, %v106, %v107
  %v186 = vsel %vm147, %v105, %v106
  %v187 = vsel %vm147, %v104, %v105
  %v188 = vsel %vm147, %v103, %v104
  %v189 = vsel %vm147, %v102, %v103
  %v190 = vsel %vm147, %v101, %v102
  %v191 = vsel %vm147, %v100, %v101
  %v192 = vsel %vm147, %v99, %v100
  %v193 = vsel %vm147, %v98, %v99
  %v194 = vsel %vm147, %v97, %v98
  %v195 = vsel %vm147, %v96, %v97
  %v196 = vsel %vm147, %v95, %v96
  %v197 = vsel %vm147, %v94, %v95
  %v198 = vsel %vm147, %v93, %v94
  %v199 = vsel %vm147, %v92, %v93
  %v200 = vsel %vm147, %v91, %v92
  %v201 = vsel %vm147, %v90, %v91
  %v202 = vsel %vm147, %v89, %v90
  %v203 = vsel %vm147, %v88, %v89
  %v204 = vsel %vm147, %v87, %v88
  %v205 = vsel %vm147, %v86, %v87
  %v206 = vsel %vm147, %v85, %v86
  %v207 = vsel %vm147, %v84, %v85
  %v208 = vsel %vm147, %v83, %v84
  %v209 = vsel %vm147, %v82, %v83
  %v210 = vsel %vm147, %v81, %v82
  %v211 = vsel %vm147, %v144, %v81
  %276 = vrot.lane.b32.xlu0 %v210, 4
  %v277 = vpop.permute.xlu0 %276
  %278 = vrot.lane.b32.xlu0 %v209, 4
  %v279 = vpop.permute.xlu0 %278
  %280 = vrot.lane.b32.xlu0 %v208, 4
  %v281 = vpop.permute.xlu0 %280
  %282 = vrot.lane.b32.xlu0 %v207, 4
  %v283 = vpop.permute.xlu0 %282
  %284 = vrot.lane.b32.xlu0 %v206, 4
  %v285 = vpop.permute.xlu0 %284
  %286 = vrot.lane.b32.xlu0 %v205, 4
  %v287 = vpop.permute.xlu0 %286
  %288 = vrot.lane.b32.xlu0 %v204, 4
  %v289 = vpop.permute.xlu0 %288
  %290 = vrot.lane.b32.xlu0 %v203, 4
  %v291 = vpop.permute.xlu0 %290
  %292 = vrot.lane.b32.xlu0 %v202, 4
  %v293 = vpop.permute.xlu0 %292
  %294 = vrot.lane.b32.xlu0 %v201, 4
  %v295 = vpop.permute.xlu0 %294
  %296 = vrot.lane.b32.xlu0 %v200, 4
  %v297 = vpop.permute.xlu0 %296
  %298 = vrot.lane.b32.xlu0 %v199, 4
  %v299 = vpop.permute.xlu0 %298
  %300 = vrot.lane.b32.xlu0 %v198, 4
  %v301 = vpop.permute.xlu0 %300
  %302 = vrot.lane.b32.xlu0 %v197, 4
  %v303 = vpop.permute.xlu0 %302
  %304 = vrot.lane.b32.xlu0 %v196, 4
  %v305 = vpop.permute.xlu0 %304
  %306 = vrot.lane.b32.xlu0 %v195, 4
  %v307 = vpop.permute.xlu0 %306
  %308 = vrot.lane.b32.xlu0 %v194, 4
  %v309 = vpop.permute.xlu0 %308
  %310 = vrot.lane.b32.xlu0 %v193, 4
  %v311 = vpop.permute.xlu0 %310
  %312 = vrot.lane.b32.xlu0 %v192, 4
  %v313 = vpop.permute.xlu0 %312
  %314 = vrot.lane.b32.xlu0 %v191, 4
  %v315 = vpop.permute.xlu0 %314
  %316 = vrot.lane.b32.xlu0 %v190, 4
  %v317 = vpop.permute.xlu0 %316
  %318 = vrot.lane.b32.xlu0 %v189, 4
  %v319 = vpop.permute.xlu0 %318
  %320 = vrot.lane.b32.xlu0 %v188, 4
  %v321 = vpop.permute.xlu0 %320
  %322 = vrot.lane.b32.xlu0 %v187, 4
  %v323 = vpop.permute.xlu0 %322
  %324 = vrot.lane.b32.xlu0 %v186, 4
  %v325 = vpop.permute.xlu0 %324
  %326 = vrot.lane.b32.xlu0 %v185, 4
  %v327 = vpop.permute.xlu0 %326
  %328 = vrot.lane.b32.xlu0 %v184, 4
  %v329 = vpop.permute.xlu0 %328
  %330 = vrot.lane.b32.xlu0 %v183, 4
  %v331 = vpop.permute.xlu0 %330
  %332 = vrot.lane.b32.xlu0 %v182, 4
  %v333 = vpop.permute.xlu0 %332
  %334 = vrot.lane.b32.xlu0 %v181, 4
  %v335 = vpop.permute.xlu0 %334
  %336 = vrot.lane.b32.xlu0 %v180, 4
  %v337 = vpop.permute.xlu0 %336
  %338 = vrot.lane.b32.xlu0 %v179, 4
  %v339 = vpop.permute.xlu0 %338
  %340 = vrot.lane.b32.xlu0 %v178, 4
  %v341 = vpop.permute.xlu0 %340
  %342 = vrot.lane.b32.xlu0 %v177, 4
  %v343 = vpop.permute.xlu0 %342
  %344 = vrot.lane.b32.xlu0 %v176, 4
  %v345 = vpop.permute.xlu0 %344
  %346 = vrot.lane.b32.xlu0 %v175, 4
  %v347 = vpop.permute.xlu0 %346
  %348 = vrot.lane.b32.xlu0 %v174, 4
  %v349 = vpop.permute.xlu0 %348
  %350 = vrot.lane.b32.xlu0 %v173, 4
  %v351 = vpop.permute.xlu0 %350
  %352 = vrot.lane.b32.xlu0 %v172, 4
  %v353 = vpop.permute.xlu0 %352
  %354 = vrot.lane.b32.xlu0 %v171, 4
  %v355 = vpop.permute.xlu0 %354
  %356 = vrot.lane.b32.xlu0 %v170, 4
  %v357 = vpop.permute.xlu0 %356
  %358 = vrot.lane.b32.xlu0 %v169, 4
  %v359 = vpop.permute.xlu0 %358
  %360 = vrot.lane.b32.xlu0 %v168, 4
  %v361 = vpop.permute.xlu0 %360
  %362 = vrot.lane.b32.xlu0 %v167, 4
  %v363 = vpop.permute.xlu0 %362
  %364 = vrot.lane.b32.xlu0 %v166, 4
  %v365 = vpop.permute.xlu0 %364
  %366 = vrot.lane.b32.xlu0 %v165, 4
  %v367 = vpop.permute.xlu0 %366
  %368 = vrot.lane.b32.xlu0 %v164, 4
  %v369 = vpop.permute.xlu0 %368
  %370 = vrot.lane.b32.xlu0 %v163, 4
  %v371 = vpop.permute.xlu0 %370
  %372 = vrot.lane.b32.xlu0 %v162, 4
  %v373 = vpop.permute.xlu0 %372
  %374 = vrot.lane.b32.xlu0 %v161, 4
  %v375 = vpop.permute.xlu0 %374
  %376 = vrot.lane.b32.xlu0 %v160, 4
  %v377 = vpop.permute.xlu0 %376
  %378 = vrot.lane.b32.xlu0 %v159, 4
  %v379 = vpop.permute.xlu0 %378
  %380 = vrot.lane.b32.xlu0 %v158, 4
  %v381 = vpop.permute.xlu0 %380
  %382 = vrot.lane.b32.xlu0 %v157, 4
  %v383 = vpop.permute.xlu0 %382
  %384 = vrot.lane.b32.xlu0 %v156, 4
  %v385 = vpop.permute.xlu0 %384
  %386 = vrot.lane.b32.xlu0 %v155, 4
  %v387 = vpop.permute.xlu0 %386
  %388 = vrot.lane.b32.xlu0 %v154, 4
  %v389 = vpop.permute.xlu0 %388
  %390 = vrot.lane.b32.xlu0 %v153, 4
  %v391 = vpop.permute.xlu0 %390
  %392 = vrot.lane.b32.xlu0 %v152, 4
  %v393 = vpop.permute.xlu0 %392
  %394 = vrot.lane.b32.xlu0 %v151, 4
  %v395 = vpop.permute.xlu0 %394
  %396 = vrot.lane.b32.xlu0 %v150, 4
  %v397 = vpop.permute.xlu0 %396
  %398 = vrot.lane.b32.xlu0 %v149, 4
  %v399 = vpop.permute.xlu0 %398
  %400 = vrot.lane.b32.xlu0 %v148, 4
  %v401 = vpop.permute.xlu0 %400
  %402 = vrot.lane.b32.xlu0 %v211, 4
  %v403 = vpop.permute.xlu0 %402
  %532 = vrot.lane.b32.xlu0 %v19, 8
  %v533 = vpop.permute.xlu0 %532
  %534 = vrot.lane.b32.xlu0 %v20, 8
  %v535 = vpop.permute.xlu0 %534
  %536 = vrot.lane.b32.xlu0 %v21, 8
  %v537 = vpop.permute.xlu0 %536
  %538 = vrot.lane.b32.xlu0 %v22, 8
  %v539 = vpop.permute.xlu0 %538
  %540 = vrot.lane.b32.xlu0 %v23, 8
  %v541 = vpop.permute.xlu0 %540
  %542 = vrot.lane.b32.xlu0 %v24, 8
  %v543 = vpop.permute.xlu0 %542
  %544 = vrot.lane.b32.xlu0 %v25, 8
  %v545 = vpop.permute.xlu0 %544
  %546 = vrot.lane.b32.xlu0 %v26, 8
  %v547 = vpop.permute.xlu0 %546
  %548 = vrot.lane.b32.xlu0 %v27, 8
  %v549 = vpop.permute.xlu0 %548
  %550 = vrot.lane.b32.xlu0 %v28, 8
  %v551 = vpop.permute.xlu0 %550
  %552 = vrot.lane.b32.xlu0 %v29, 8
  %v553 = vpop.permute.xlu0 %552
  %554 = vrot.lane.b32.xlu0 %v30, 8
  %v555 = vpop.permute.xlu0 %554
  %556 = vrot.lane.b32.xlu0 %v31, 8
  %v557 = vpop.permute.xlu0 %556
  %558 = vrot.lane.b32.xlu0 %v32, 8
  %v559 = vpop.permute.xlu0 %558
  %560 = vrot.lane.b32.xlu0 %v33, 8
  %v561 = vpop.permute.xlu0 %560
  %562 = vrot.lane.b32.xlu0 %v34, 8
  %v563 = vpop.permute.xlu0 %562
  %564 = vrot.lane.b32.xlu0 %v35, 8
  %v565 = vpop.permute.xlu0 %564
  %566 = vrot.lane.b32.xlu0 %v36, 8
  %v567 = vpop.permute.xlu0 %566
  %568 = vrot.lane.b32.xlu0 %v37, 8
  %v569 = vpop.permute.xlu0 %568
  %570 = vrot.lane.b32.xlu0 %v38, 8
  %v571 = vpop.permute.xlu0 %570
  %572 = vrot.lane.b32.xlu0 %v39, 8
  %v573 = vpop.permute.xlu0 %572
  %574 = vrot.lane.b32.xlu0 %v40, 8
  %v575 = vpop.permute.xlu0 %574
  %576 = vrot.lane.b32.xlu0 %v41, 8
  %v577 = vpop.permute.xlu0 %576
  %578 = vrot.lane.b32.xlu0 %v42, 8
  %v579 = vpop.permute.xlu0 %578
  %580 = vrot.lane.b32.xlu0 %v43, 8
  %v581 = vpop.permute.xlu0 %580
  %582 = vrot.lane.b32.xlu0 %v44, 8
  %v583 = vpop.permute.xlu0 %582
  %584 = vrot.lane.b32.xlu0 %v45, 8
  %v585 = vpop.permute.xlu0 %584
  %586 = vrot.lane.b32.xlu0 %v46, 8
  %v587 = vpop.permute.xlu0 %586
  %588 = vrot.lane.b32.xlu0 %v47, 8
  %v589 = vpop.permute.xlu0 %588
  %590 = vrot.lane.b32.xlu0 %v48, 8
  %v591 = vpop.permute.xlu0 %590
  %592 = vrot.lane.b32.xlu0 %v49, 8
  %v593 = vpop.permute.xlu0 %592
  %594 = vrot.lane.b32.xlu0 %v50, 8
  %v595 = vpop.permute.xlu0 %594
  %596 = vrot.lane.b32.xlu0 %v51, 8
  %v597 = vpop.permute.xlu0 %596
  %598 = vrot.lane.b32.xlu0 %v52, 8
  %v599 = vpop.permute.xlu0 %598
  %600 = vrot.lane.b32.xlu0 %v53, 8
  %v601 = vpop.permute.xlu0 %600
  %602 = vrot.lane.b32.xlu0 %v54, 8
  %v603 = vpop.permute.xlu0 %602
  %604 = vrot.lane.b32.xlu0 %v55, 8
  %v605 = vpop.permute.xlu0 %604
  %606 = vrot.lane.b32.xlu0 %v56, 8
  %v607 = vpop.permute.xlu0 %606
  %608 = vrot.lane.b32.xlu0 %v57, 8
  %v609 = vpop.permute.xlu0 %608
  %610 = vrot.lane.b32.xlu0 %v58, 8
  %v611 = vpop.permute.xlu0 %610
  %612 = vrot.lane.b32.xlu0 %v59, 8
  %v613 = vpop.permute.xlu0 %612
  %614 = vrot.lane.b32.xlu0 %v60, 8
  %v615 = vpop.permute.xlu0 %614
  %616 = vrot.lane.b32.xlu0 %v61, 8
  %v617 = vpop.permute.xlu0 %616
  %618 = vrot.lane.b32.xlu0 %v62, 8
  %v619 = vpop.permute.xlu0 %618
  %620 = vrot.lane.b32.xlu0 %v63, 8
  %v621 = vpop.permute.xlu0 %620
  %622 = vrot.lane.b32.xlu0 %v64, 8
  %v623 = vpop.permute.xlu0 %622
  %624 = vrot.lane.b32.xlu0 %v65, 8
  %v625 = vpop.permute.xlu0 %624
  %626 = vrot.lane.b32.xlu0 %v66, 8
  %v627 = vpop.permute.xlu0 %626
  %628 = vrot.lane.b32.xlu0 %v67, 8
  %v629 = vpop.permute.xlu0 %628
  %630 = vrot.lane.b32.xlu0 %v68, 8
  %v631 = vpop.permute.xlu0 %630
  %632 = vrot.lane.b32.xlu0 %v69, 8
  %v633 = vpop.permute.xlu0 %632
  %634 = vrot.lane.b32.xlu0 %v70, 8
  %v635 = vpop.permute.xlu0 %634
  %636 = vrot.lane.b32.xlu0 %v71, 8
  %v637 = vpop.permute.xlu0 %636
  %638 = vrot.lane.b32.xlu0 %v72, 8
  %v639 = vpop.permute.xlu0 %638
  %640 = vrot.lane.b32.xlu0 %v73, 8
  %v641 = vpop.permute.xlu0 %640
  %642 = vrot.lane.b32.xlu0 %v74, 8
  %v643 = vpop.permute.xlu0 %642
  %644 = vrot.lane.b32.xlu0 %v75, 8
  %v645 = vpop.permute.xlu0 %644
  %646 = vrot.lane.b32.xlu0 %v76, 8
  %v647 = vpop.permute.xlu0 %646
  %648 = vrot.lane.b32.xlu0 %v77, 8
  %v649 = vpop.permute.xlu0 %648
  %650 = vrot.lane.b32.xlu0 %v78, 8
  %v651 = vpop.permute.xlu0 %650
  %652 = vrot.lane.b32.xlu0 %v79, 8
  %v653 = vpop.permute.xlu0 %652
  %654 = vrot.lane.b32.xlu0 %v80, 8
  %v655 = vpop.permute.xlu0 %654
  %656 = vrot.lane.b32.xlu0 %v17, 8
  %v657 = vpop.permute.xlu0 %656
  %658 = vrot.lane.b32.xlu0 %v18, 8
  %v659 = vpop.permute.xlu0 %658
  %724 = vrot.lane.b32.xlu0 %v208, 12
  %v725 = vpop.permute.xlu0 %724
  %726 = vrot.lane.b32.xlu0 %v207, 12
  %v727 = vpop.permute.xlu0 %726
  %728 = vrot.lane.b32.xlu0 %v206, 12
  %v729 = vpop.permute.xlu0 %728
  %730 = vrot.lane.b32.xlu0 %v205, 12
  %v731 = vpop.permute.xlu0 %730
  %732 = vrot.lane.b32.xlu0 %v204, 12
  %v733 = vpop.permute.xlu0 %732
  %734 = vrot.lane.b32.xlu0 %v203, 12
  %v735 = vpop.permute.xlu0 %734
  %736 = vrot.lane.b32.xlu0 %v202, 12
  %v737 = vpop.permute.xlu0 %736
  %738 = vrot.lane.b32.xlu0 %v201, 12
  %v739 = vpop.permute.xlu0 %738
  %740 = vrot.lane.b32.xlu0 %v200, 12
  %v741 = vpop.permute.xlu0 %740
  %742 = vrot.lane.b32.xlu0 %v199, 12
  %v743 = vpop.permute.xlu0 %742
  %744 = vrot.lane.b32.xlu0 %v198, 12
  %v745 = vpop.permute.xlu0 %744
  %746 = vrot.lane.b32.xlu0 %v197, 12
  %v747 = vpop.permute.xlu0 %746
  %748 = vrot.lane.b32.xlu0 %v196, 12
  %v749 = vpop.permute.xlu0 %748
  %750 = vrot.lane.b32.xlu0 %v195, 12
  %v751 = vpop.permute.xlu0 %750
  %752 = vrot.lane.b32.xlu0 %v194, 12
  %v753 = vpop.permute.xlu0 %752
  %754 = vrot.lane.b32.xlu0 %v193, 12
  %v755 = vpop.permute.xlu0 %754
  %756 = vrot.lane.b32.xlu0 %v192, 12
  %v757 = vpop.permute.xlu0 %756
  %758 = vrot.lane.b32.xlu0 %v191, 12
  %v759 = vpop.permute.xlu0 %758
  %760 = vrot.lane.b32.xlu0 %v190, 12
  %v761 = vpop.permute.xlu0 %760
  %762 = vrot.lane.b32.xlu0 %v189, 12
  %v763 = vpop.permute.xlu0 %762
  %764 = vrot.lane.b32.xlu0 %v188, 12
  %v765 = vpop.permute.xlu0 %764
  %766 = vrot.lane.b32.xlu0 %v187, 12
  %v767 = vpop.permute.xlu0 %766
  %768 = vrot.lane.b32.xlu0 %v186, 12
  %v769 = vpop.permute.xlu0 %768
  %770 = vrot.lane.b32.xlu0 %v185, 12
  %v771 = vpop.permute.xlu0 %770
  %772 = vrot.lane.b32.xlu0 %v184, 12
  %v773 = vpop.permute.xlu0 %772
  %774 = vrot.lane.b32.xlu0 %v183, 12
  %v775 = vpop.permute.xlu0 %774
  %776 = vrot.lane.b32.xlu0 %v182, 12
  %v777 = vpop.permute.xlu0 %776
  %778 = vrot.lane.b32.xlu0 %v181, 12
  %v779 = vpop.permute.xlu0 %778
  %780 = vrot.lane.b32.xlu0 %v180, 12
  %v781 = vpop.permute.xlu0 %780
  %782 = vrot.lane.b32.xlu0 %v179, 12
  %v783 = vpop.permute.xlu0 %782
  %784 = vrot.lane.b32.xlu0 %v178, 12
  %v785 = vpop.permute.xlu0 %784
  %786 = vrot.lane.b32.xlu0 %v177, 12
  %v787 = vpop.permute.xlu0 %786
  %788 = vrot.lane.b32.xlu0 %v176, 12
  %v789 = vpop.permute.xlu0 %788
  %790 = vrot.lane.b32.xlu0 %v175, 12
  %v791 = vpop.permute.xlu0 %790
  %792 = vrot.lane.b32.xlu0 %v174, 12
  %v793 = vpop.permute.xlu0 %792
  %794 = vrot.lane.b32.xlu0 %v173, 12
  %v795 = vpop.permute.xlu0 %794
  %796 = vrot.lane.b32.xlu0 %v172, 12
  %v797 = vpop.permute.xlu0 %796
  %798 = vrot.lane.b32.xlu0 %v171, 12
  %v799 = vpop.permute.xlu0 %798
  %800 = vrot.lane.b32.xlu0 %v170, 12
  %v801 = vpop.permute.xlu0 %800
  %802 = vrot.lane.b32.xlu0 %v169, 12
  %v803 = vpop.permute.xlu0 %802
  %804 = vrot.lane.b32.xlu0 %v168, 12
  %v805 = vpop.permute.xlu0 %804
  %806 = vrot.lane.b32.xlu0 %v167, 12
  %v807 = vpop.permute.xlu0 %806
  %808 = vrot.lane.b32.xlu0 %v166, 12
  %v809 = vpop.permute.xlu0 %808
  %810 = vrot.lane.b32.xlu0 %v165, 12
  %v811 = vpop.permute.xlu0 %810
  %812 = vrot.lane.b32.xlu0 %v164, 12
  %v813 = vpop.permute.xlu0 %812
  %814 = vrot.lane.b32.xlu0 %v163, 12
  %v815 = vpop.permute.xlu0 %814
  %816 = vrot.lane.b32.xlu0 %v162, 12
  %v817 = vpop.permute.xlu0 %816
  %818 = vrot.lane.b32.xlu0 %v161, 12
  %v819 = vpop.permute.xlu0 %818
  %820 = vrot.lane.b32.xlu0 %v160, 12
  %v821 = vpop.permute.xlu0 %820
  %822 = vrot.lane.b32.xlu0 %v159, 12
  %v823 = vpop.permute.xlu0 %822
  %824 = vrot.lane.b32.xlu0 %v158, 12
  %v825 = vpop.permute.xlu0 %824
  %826 = vrot.lane.b32.xlu0 %v157, 12
  %v827 = vpop.permute.xlu0 %826
  %828 = vrot.lane.b32.xlu0 %v156, 12
  %v829 = vpop.permute.xlu0 %828
  %830 = vrot.lane.b32.xlu0 %v155, 12
  %v831 = vpop.permute.xlu0 %830
  %832 = vrot.lane.b32.xlu0 %v154, 12
  %v833 = vpop.permute.xlu0 %832
  %834 = vrot.lane.b32.xlu0 %v153, 12
  %v835 = vpop.permute.xlu0 %834
  %836 = vrot.lane.b32.xlu0 %v152, 12
  %v837 = vpop.permute.xlu0 %836
  %838 = vrot.lane.b32.xlu0 %v151, 12
  %v839 = vpop.permute.xlu0 %838
  %840 = vrot.lane.b32.xlu0 %v150, 12
  %v841 = vpop.permute.xlu0 %840
  %842 = vrot.lane.b32.xlu0 %v149, 12
  %v843 = vpop.permute.xlu0 %842
  %844 = vrot.lane.b32.xlu0 %v148, 12
  %v845 = vpop.permute.xlu0 %844
  %846 = vrot.lane.b32.xlu0 %v211, 12
  %v847 = vpop.permute.xlu0 %846
  %848 = vrot.lane.b32.xlu0 %v210, 12
  %v849 = vpop.permute.xlu0 %848
  %850 = vrot.lane.b32.xlu0 %v209, 12
  %v851 = vpop.permute.xlu0 %850
  %vm916 = vcmask 31744
  %v917 = vsel %vm916, %v17, %v277
  %v918 = vsel %vm916, %v18, %v279
  %v919 = vsel %vm916, %v19, %v281
  %v920 = vsel %vm916, %v20, %v283
  %v921 = vsel %vm916, %v21, %v285
  %v922 = vsel %vm916, %v22, %v287
  %v923 = vsel %vm916, %v23, %v289
  %v924 = vsel %vm916, %v24, %v291
  %v925 = vsel %vm916, %v25, %v293
  %v926 = vsel %vm916, %v26, %v295
  %v927 = vsel %vm916, %v27, %v297
  %v928 = vsel %vm916, %v28, %v299
  %v929 = vsel %vm916, %v29, %v301
  %v930 = vsel %vm916, %v30, %v303
  %v931 = vsel %vm916, %v31, %v305
  %v932 = vsel %vm916, %v32, %v307
  %v933 = vsel %vm916, %v33, %v309
  %v934 = vsel %vm916, %v34, %v311
  %v935 = vsel %vm916, %v35, %v313
  %v936 = vsel %vm916, %v36, %v315
  %v937 = vsel %vm916, %v37, %v317
  %v938 = vsel %vm916, %v38, %v319
  %v939 = vsel %vm916, %v39, %v321
  %v940 = vsel %vm916, %v40, %v323
  %v941 = vsel %vm916, %v41, %v325
  %v942 = vsel %vm916, %v42, %v327
  %v943 = vsel %vm916, %v43, %v329
  %v944 = vsel %vm916, %v44, %v331
  %v945 = vsel %vm916, %v45, %v333
  %v946 = vsel %vm916, %v46, %v335
  %v947 = vsel %vm916, %v47, %v337
  %v948 = vsel %vm916, %v48, %v339
  %v949 = vsel %vm916, %v49, %v341
  %v950 = vsel %vm916, %v50, %v343
  %v951 = vsel %vm916, %v51, %v345
  %v952 = vsel %vm916, %v52, %v347
  %v953 = vsel %vm916, %v53, %v349
  %v954 = vsel %vm916, %v54, %v351
  %v955 = vsel %vm916, %v55, %v353
  %v956 = vsel %vm916, %v56, %v355
  %v957 = vsel %vm916, %v57, %v357
  %v958 = vsel %vm916, %v58, %v359
  %v959 = vsel %vm916, %v59, %v361
  %v960 = vsel %vm916, %v60, %v363
  %v961 = vsel %vm916, %v61, %v365
  %v962 = vsel %vm916, %v62, %v367
  %v963 = vsel %vm916, %v63, %v369
  %v964 = vsel %vm916, %v64, %v371
  %v965 = vsel %vm916, %v65, %v373
  %v966 = vsel %vm916, %v66, %v375
  %v967 = vsel %vm916, %v67, %v377
  %v968 = vsel %vm916, %v68, %v379
  %v969 = vsel %vm916, %v69, %v381
  %v970 = vsel %vm916, %v70, %v383
  %v971 = vsel %vm916, %v71, %v385
  %v972 = vsel %vm916, %v72, %v387
  %v973 = vsel %vm916, %v73, %v389
  %v974 = vsel %vm916, %v74, %v391
  %v975 = vsel %vm916, %v75, %v393
  %v976 = vsel %vm916, %v76, %v395
  %v977 = vsel %vm916, %v77, %v397
  %v978 = vsel %vm916, %v78, %v399
  %v979 = vsel %vm916, %v79, %v401
  %v980 = vsel %vm916, %v80, %v403
  %vm981 = vcmask 64512
  %v982 = vsel %vm981, %v917, %v533
  %v983 = vsel %vm981, %v918, %v535
  %v984 = vsel %vm981, %v919, %v537
  %v985 = vsel %vm981, %v920, %v539
  %v986 = vsel %vm981, %v921, %v541
  %v987 = vsel %vm981, %v922, %v543
  %v988 = vsel %vm981, %v923, %v545
  %v989 = vsel %vm981, %v924, %v547
  %v990 = vsel %vm981, %v925, %v549
  %v991 = vsel %vm981, %v926, %v551
  %v992 = vsel %vm981, %v927, %v553
  %v993 = vsel %vm981, %v928, %v555
  %v994 = vsel %vm981, %v929, %v557
  %v995 = vsel %vm981, %v930, %v559
  %v996 = vsel %vm981, %v931, %v561
  %v997 = vsel %vm981, %v932, %v563
  %v998 = vsel %vm981, %v933, %v565
  %v999 = vsel %vm981, %v934, %v567
  %v1000 = vsel %vm981, %v935, %v569
  %v1001 = vsel %vm981, %v936, %v571
  %v1002 = vsel %vm981, %v937, %v573
  %v1003 = vsel %vm981, %v938, %v575
  %v1004 = vsel %vm981, %v939, %v577
  %v1005 = vsel %vm981, %v940, %v579
  %v1006 = vsel %vm981, %v941, %v581
  %v1007 = vsel %vm981, %v942, %v583
  %v1008 = vsel %vm981, %v943, %v585
  %v1009 = vsel %vm981, %v944, %v587
  %v1010 = vsel %vm981, %v945, %v589
  %v1011 = vsel %vm981, %v946, %v591
  %v1012 = vsel %vm981, %v947, %v593
  %v1013 = vsel %vm981, %v948, %v595
  %v1014 = vsel %vm981, %v949, %v597
  %v1015 = vsel %vm981, %v950, %v599
  %v1016 = vsel %vm981, %v951, %v601
  %v1017 = vsel %vm981, %v952, %v603
  %v1018 = vsel %vm981, %v953, %v605
  %v1019 = vsel %vm981, %v954, %v607
  %v1020 = vsel %vm981, %v955, %v609
  %v1021 = vsel %vm981, %v956, %v611
  %v1022 = vsel %vm981, %v957, %v613
  %v1023 = vsel %vm981, %v958, %v615
  %v1024 = vsel %vm981, %v959, %v617
  %v1025 = vsel %vm981, %v960, %v619
  %v1026 = vsel %vm981, %v961, %v621
  %v1027 = vsel %vm981, %v962, %v623
  %v1028 = vsel %vm981, %v963, %v625
  %v1029 = vsel %vm981, %v964, %v627
  %v1030 = vsel %vm981, %v965, %v629
  %v1031 = vsel %vm981, %v966, %v631
  %v1032 = vsel %vm981, %v967, %v633
  %v1033 = vsel %vm981, %v968, %v635
  %v1034 = vsel %vm981, %v969, %v637
  %v1035 = vsel %vm981, %v970, %v639
  %v1036 = vsel %vm981, %v971, %v641
  %v1037 = vsel %vm981, %v972, %v643
  %v1038 = vsel %vm981, %v973, %v645
  %v1039 = vsel %vm981, %v974, %v647
  %v1040 = vsel %vm981, %v975, %v649
  %v1041 = vsel %vm981, %v976, %v651
  %v1042 = vsel %vm981, %v977, %v653
  %v1043 = vsel %vm981, %v978, %v655
  %v1044 = vsel %vm981, %v979, %v657
  %v1045 = vsel %vm981, %v980, %v659
  %vm1046 = vcmask 97280
  %v1047 = vsel %vm1046, %v982, %v725
  %v1048 = vsel %vm1046, %v983, %v727
  %v1049 = vsel %vm1046, %v984, %v729
  %v1050 = vsel %vm1046, %v985, %v731
  %v1051 = vsel %vm1046, %v986, %v733
  %v1052 = vsel %vm1046, %v987, %v735
  %v1053 = vsel %vm1046, %v988, %v737
  %v1054 = vsel %vm1046, %v989, %v739
  %v1055 = vsel %vm1046, %v990, %v741
  %v1056 = vsel %vm1046, %v991, %v743
  %v1057 = vsel %vm1046, %v992, %v745
  %v1058 = vsel %vm1046, %v993, %v747
  %v1059 = vsel %vm1046, %v994, %v749
  %v1060 = vsel %vm1046, %v995, %v751
  %v1061 = vsel %vm1046, %v996, %v753
  %v1062 = vsel %vm1046, %v997, %v755
  %v1063 = vsel %vm1046, %v998, %v757
  %v1064 = vsel %vm1046, %v999, %v759
  %v1065 = vsel %vm1046, %v1000, %v761
  %v1066 = vsel %vm1046, %v1001, %v763
  %v1067 = vsel %vm1046, %v1002, %v765
  %v1068 = vsel %vm1046, %v1003, %v767
  %v1069 = vsel %vm1046, %v1004, %v769
  %v1070 = vsel %vm1046, %v1005, %v771
  %v1071 = vsel %vm1046, %v1006, %v773
  %v1072 = vsel %vm1046, %v1007, %v775
  %v1073 = vsel %vm1046, %v1008, %v777
  %v1074 = vsel %vm1046, %v1009, %v779
  %v1075 = vsel %vm1046, %v1010, %v781
  %v1076 = vsel %vm1046, %v1011, %v783
  %v1077 = vsel %vm1046, %v1012, %v785
  %v1078 = vsel %vm1046, %v1013, %v787
  %v1079 = vsel %vm1046, %v1014, %v789
  %v1080 = vsel %vm1046, %v1015, %v791
  %v1081 = vsel %vm1046, %v1016, %v793
  %v1082 = vsel %vm1046, %v1017, %v795
  %v1083 = vsel %vm1046, %v1018, %v797
  %v1084 = vsel %vm1046, %v1019, %v799
  %v1085 = vsel %vm1046, %v1020, %v801
  %v1086 = vsel %vm1046, %v1021, %v803
  %v1087 = vsel %vm1046, %v1022, %v805
  %v1088 = vsel %vm1046, %v1023, %v807
  %v1089 = vsel %vm1046, %v1024, %v809
  %v1090 = vsel %vm1046, %v1025, %v811
  %v1091 = vsel %vm1046, %v1026, %v813
  %v1092 = vsel %vm1046, %v1027, %v815
  %v1093 = vsel %vm1046, %v1028, %v817
  %v1094 = vsel %vm1046, %v1029, %v819
  %v1095 = vsel %vm1046, %v1030, %v821
  %v1096 = vsel %vm1046, %v1031, %v823
  %v1097 = vsel %vm1046, %v1032, %v825
  %v1098 = vsel %vm1046, %v1033, %v827
  %v1099 = vsel %vm1046, %v1034, %v829
  %v1100 = vsel %vm1046, %v1035, %v831
  %v1101 = vsel %vm1046, %v1036, %v833
  %v1102 = vsel %vm1046, %v1037, %v835
  %v1103 = vsel %vm1046, %v1038, %v837
  %v1104 = vsel %vm1046, %v1039, %v839
  %v1105 = vsel %vm1046, %v1040, %v841
  %v1106 = vsel %vm1046, %v1041, %v843
  %v1107 = vsel %vm1046, %v1042, %v845
  %v1108 = vsel %vm1046, %v1043, %v847
  %v1109 = vsel %vm1046, %v1044, %v849
  %v1110 = vsel %vm1046, %v1045, %v851
  %v1111 = vld [vmem:[%s1] sm:$0xff]
  %v1112 = vld [vmem:[%s1 + $0x8] sm:$0xff]
  %vm1113 = vcmask 130048
  %v1115 = vsel %vm1113, %v1047, 0
  %v1118 = vsel %vm1113, %v1048, 0
  %v1121 = vsel %vm1113, %v1049, 0
  %v1124 = vsel %vm1113, %v1050, 0
  %v1127 = vsel %vm1113, %v1051, 0
  %v1130 = vsel %vm1113, %v1052, 0
  %v1133 = vsel %vm1113, %v1053, 0
  %v1136 = vsel %vm1113, %v1054, 0
  %v1139 = vsel %vm1113, %v1055, 0
  %v1142 = vsel %vm1113, %v1056, 0
  %v1145 = vsel %vm1113, %v1057, 0
  %v1148 = vsel %vm1113, %v1058, 0
  %v1151 = vsel %vm1113, %v1059, 0
  %v1154 = vsel %vm1113, %v1060, 0
  %v1157 = vsel %vm1113, %v1061, 0
  %v1160 = vsel %vm1113, %v1062, 0
  %v1163 = vsel %vm1113, %v1063, 0
  %v1166 = vsel %vm1113, %v1064, 0
  %v1169 = vsel %vm1113, %v1065, 0
  %v1172 = vsel %vm1113, %v1066, 0
  %v1175 = vsel %vm1113, %v1067, 0
  %v1178 = vsel %vm1113, %v1068, 0
  %v1181 = vsel %vm1113, %v1069, 0
  %v1184 = vsel %vm1113, %v1070, 0
  %v1187 = vsel %vm1113, %v1071, 0
  %v1190 = vsel %vm1113, %v1072, 0
  %v1193 = vsel %vm1113, %v1073, 0
  %v1196 = vsel %vm1113, %v1074, 0
  %v1199 = vsel %vm1113, %v1075, 0
  %v1202 = vsel %vm1113, %v1076, 0
  %v1205 = vsel %vm1113, %v1077, 0
  %v1208 = vsel %vm1113, %v1078, 0
  %v1211 = vsel %vm1113, %v1079, 0
  %v1214 = vsel %vm1113, %v1080, 0
  %v1217 = vsel %vm1113, %v1081, 0
  %v1220 = vsel %vm1113, %v1082, 0
  %v1223 = vsel %vm1113, %v1083, 0
  %v1226 = vsel %vm1113, %v1084, 0
  %v1229 = vsel %vm1113, %v1085, 0
  %v1232 = vsel %vm1113, %v1086, 0
  %v1235 = vsel %vm1113, %v1087, 0
  %v1238 = vsel %vm1113, %v1088, 0
  %v1241 = vsel %vm1113, %v1089, 0
  %v1244 = vsel %vm1113, %v1090, 0
  %v1247 = vsel %vm1113, %v1091, 0
  %v1250 = vsel %vm1113, %v1092, 0
  %v1253 = vsel %vm1113, %v1093, 0
  %v1256 = vsel %vm1113, %v1094, 0
  %v1259 = vsel %vm1113, %v1095, 0
  %v1262 = vsel %vm1113, %v1096, 0
  %v1265 = vsel %vm1113, %v1097, 0
  %v1268 = vsel %vm1113, %v1098, 0
  %v1271 = vsel %vm1113, %v1099, 0
  %v1274 = vsel %vm1113, %v1100, 0
  %v1277 = vsel %vm1113, %v1101, 0
  %v1280 = vsel %vm1113, %v1102, 0
  %v1283 = vsel %vm1113, %v1103, 0
  %v1286 = vsel %vm1113, %v1104, 0
  %v1289 = vsel %vm1113, %v1105, 0
  %v1292 = vsel %vm1113, %v1106, 0
  %v1295 = vsel %vm1113, %v1107, 0
  %v1298 = vsel %vm1113, %v1108, 0
  %v1301 = vsel %vm1113, %v1109, 0
  %v1304 = vsel %vm1113, %v1110, 0
  %1306 = vmatprep.subr.mxu0 0.0
  %1307 = vmatpush1.msra.mxu0 %v1111
  %1308 = vmatprep.subr.mxu0 0.0
  %1309 = vmatpush1.msra.mxu0 %v1112
  %1310 = vmatprep.subr.mxu0 0.0
  %1311 = vmatpush1.msra.mxu0 0.0
  %1312 = vmatprep.subr.mxu0 0.0
  %1313 = vmatpush1.msra.mxu0 0.0
  %1314 = vmatprep.subr.mxu0 0.0
  %1315 = vmatpush1.msra.mxu0 0.0
  %1316 = vmatprep.subr.mxu0 0.0
  %1317 = vmatpush1.msra.mxu0 0.0
  %1318 = vmatprep.subr.mxu0 0.0
  %1319 = vmatpush1.msra.mxu0 0.0
  %1320 = vmatprep.subr.mxu0 0.0
  %1321 = vmatpush1.msra.mxu0 0.0
  %1322 = vmatprep.subr.mxu0 0.0
  %1323 = vmatpush1.msra.mxu0 0.0
  %1324 = vmatprep.subr.mxu0 0.0
  %1325 = vmatpush1.msra.mxu0 0.0
  %1326 = vmatprep.subr.mxu0 0.0
  %1327 = vmatpush1.msra.mxu0 0.0
  %1328 = vmatprep.subr.mxu0 0.0
  %1329 = vmatpush1.msra.mxu0 0.0
  %1330 = vmatprep.subr.mxu0 0.0
  %1331 = vmatpush1.msra.mxu0 0.0
  %1332 = vmatprep.subr.mxu0 0.0
  %1333 = vmatpush1.msra.mxu0 0.0
  %1334 = vmatprep.subr.mxu0 0.0
  %1335 = vmatpush1.msra.mxu0 0.0
  %1336 = vmatprep.subr.mxu0 0.0
  %1337 = vmatpush1.msra.mxu0 0.0
  %1338 = vmatprep.subr.mxu0 0.0
  %1339 = vmatpush1.msra.mxu0 0.0
  %1340 = vmatprep.subr.mxu0 0.0
  %1341 = vmatpush1.msra.mxu0 0.0
  %1342 = vmatprep.subr.mxu0 0.0
  %1343 = vmatpush1.msra.mxu0 0.0
  %1344 = vmatprep.subr.mxu0 0.0
  %1345 = vmatpush1.msra.mxu0 0.0
  %1346 = vmatprep.subr.mxu0 0.0
  %1347 = vmatpush1.msra.mxu0 0.0
  %1348 = vmatprep.subr.mxu0 0.0
  %1349 = vmatpush1.msra.mxu0 0.0
  %1350 = vmatprep.subr.mxu0 0.0
  %1351 = vmatpush1.msra.mxu0 0.0
  %1352 = vmatprep.subr.mxu0 0.0
  %1353 = vmatpush1.msra.mxu0 0.0
  %1354 = vmatprep.subr.mxu0 0.0
  %1355 = vmatpush1.msra.mxu0 0.0
  %1356 = vmatprep.subr.mxu0 0.0
  %1357 = vmatpush1.msra.mxu0 0.0
  %1358 = vmatprep.subr.mxu0 0.0
  %1359 = vmatpush1.msra.mxu0 0.0
  %1360 = vmatprep.subr.mxu0 0.0
  %1361 = vmatpush1.msra.mxu0 0.0
  %1362 = vmatprep.subr.mxu0 0.0
  %1363 = vmatpush1.msra.mxu0 0.0
  %1364 = vmatprep.subr.mxu0 0.0
  %1365 = vmatpush1.msra.mxu0 0.0
  %1366 = vmatprep.subr.mxu0 0.0
  %1367 = vmatpush1.msra.mxu0 0.0
  %1368 = vmatprep.subr.mxu0 0.0
  %1369 = vmatpush1.msra.mxu0 0.0
  %1370 = vmatprep.mubr.f32.mxu0 0.0
  %1371 = vmatmul.mubr.f32.gmra.mrb[0].mxu0 %v1115
  %v1372 = vpop.f32.mrb[0].mxu0
  %v1373 = vadd.f32 0.0, %v1372
  %v1374 = vpop.f32.mrb[0].mxu0
  %1375 = vmatprep.mubr.f32.mxu0 0.0
  %1376 = vmatmul.mubr.f32.gmra.mrb[0].mxu0 %v1118
  %v1377 = vpop.f32.mrb[0].mxu0
  %v1378 = vadd.f32 0.0, %v1377
  %v1379 = vpop.f32.mrb[0].mxu0
  %1380 = vmatprep.mubr.f32.mxu0 0.0
  %1381 = vmatmul.mubr.f32.gmra.mrb[0].mxu0 %v1121
  %v1382 = vpop.f32.mrb[0].mxu0
  %v1383 = vadd.f32 0.0, %v1382
  %v1384 = vpop.f32.mrb[0].mxu0
  %1385 = vmatprep.mubr.f32.mxu0 0.0
  %1386 = vmatmul.mubr.f32.gmra.mrb[0].mxu0 %v1124
  %v1387 = vpop.f32.mrb[0].mxu0
  %v1388 = vadd.f32 0.0, %v1387
  %v1389 = vpop.f32.mrb[0].mxu0
  %1390 = vmatprep.mubr.f32.mxu0 0.0
  %1391 = vmatmul.mubr.f32.gmra.mrb[0].mxu0 %v1127
  %v1392 = vpop.f32.mrb[0].mxu0
  %v1393 = vadd.f32 0.0, %v1392
  %v1394 = vpop.f32.mrb[0].mxu0
  %1395 = vmatprep.mubr.f32.mxu0 0.0
  %1396 = vmatmul.mubr.f32.gmra.mrb[0].mxu0 %v1130
  %v1397 = vpop.f32.mrb[0].mxu0
  %v1398 = vadd.f32 0.0, %v1397
  %v1399 = vpop.f32.mrb[0].mxu0
  %1400 = vmatprep.mubr.f32.mxu0 0.0
  %1401 = vmatmul.mubr.f32.gmra.mrb[0].mxu0 %v1133
  %v1402 = vpop.f32.mrb[0].mxu0
  %v1403 = vadd.f32 0.0, %v1402
  %v1404 = vpop.f32.mrb[0].mxu0
  %1405 = vmatprep.mubr.f32.mxu0 0.0
  %1406 = vmatmul.mubr.f32.gmra.mrb[0].mxu0 %v1136
  %v1407 = vpop.f32.mrb[0].mxu0
  %v1408 = vadd.f32 0.0, %v1407
  %v1409 = vpop.f32.mrb[0].mxu0
  %1410 = vmatprep.mubr.f32.mxu0 0.0
  %1411 = vmatmul.mubr.f32.gmra.mrb[0].mxu0 %v1139
  %v1412 = vpop.f32.mrb[0].mxu0
  %v1413 = vadd.f32 0.0, %v1412
  %v1414 = vpop.f32.mrb[0].mxu0
  %1415 = vmatprep.mubr.f32.mxu0 0.0
  %1416 = vmatmul.mubr.f32.gmra.mrb[0].mxu0 %v1142
  %v1417 = vpop.f32.mrb[0].mxu0
  %v1418 = vadd.f32 0.0, %v1417
  %v1419 = vpop.f32.mrb[0].mxu0
  %1420 = vmatprep.mubr.f32.mxu0 0.0
  %1421 = vmatmul.mubr.f32.gmra.mrb[0].mxu0 %v1145
  %v1422 = vpop.f32.mrb[0].mxu0
  %v1423 = vadd.f32 0.0, %v1422
  %v1424 = vpop.f32.mrb[0].mxu0
  %1425 = vmatprep.mubr.f32.mxu0 0.0
  %1426 = vmatmul.mubr.f32.gmra.mrb[0].mxu0 %v1148
  %v1427 = vpop.f32.mrb[0].mxu0
  %v1428 = vadd.f32 0.0, %v1427
  %v1429 = vpop.f32.mrb[0].mxu0
  %1430 = vmatprep.mubr.f32.mxu0 0.0
  %1431 = vmatmul.mubr.f32.gmra.mrb[0].mxu0 %v1151
  %v1432 = vpop.f32.mrb[0].mxu0
  %v1433 = vadd.f32 0.0, %v1432
  %v1434 = vpop.f32.mrb[0].mxu0
  %1435 = vmatprep.mubr.f32.mxu0 0.0
  %1436 = vmatmul.mubr.f32.gmra.mrb[0].mxu0 %v1154
  %v1437 = vpop.f32.mrb[0].mxu0
  %v1438 = vadd.f32 0.0, %v1437
  %v1439 = vpop.f32.mrb[0].mxu0
  %1440 = vmatprep.mubr.f32.mxu0 0.0
  %1441 = vmatmul.mubr.f32.gmra.mrb[0].mxu0 %v1157
  %v1442 = vpop.f32.mrb[0].mxu0
  %v1443 = vadd.f32 0.0, %v1442
  %v1444 = vpop.f32.mrb[0].mxu0
  %1445 = vmatprep.mubr.f32.mxu0 0.0
  %1446 = vmatmul.mubr.f32.gmra.mrb[0].mxu0 %v1160
  %v1447 = vpop.f32.mrb[0].mxu0
  %v1448 = vadd.f32 0.0, %v1447
  %v1449 = vpop.f32.mrb[0].mxu0
  %1450 = vmatprep.mubr.f32.mxu0 0.0
  %1451 = vmatmul.mubr.f32.gmra.mrb[0].mxu0 %v1163
  %v1452 = vpop.f32.mrb[0].mxu0
  %v1453 = vadd.f32 0.0, %v1452
  %v1454 = vpop.f32.mrb[0].mxu0
  %1455 = vmatprep.mubr.f32.mxu0 0.0
  %1456 = vmatmul.mubr.f32.gmra.mrb[0].mxu0 %v1166
  %v1457 = vpop.f32.mrb[0].mxu0
  %v1458 = vadd.f32 0.0, %v1457
  %v1459 = vpop.f32.mrb[0].mxu0
  %1460 = vmatprep.mubr.f32.mxu0 0.0
  %1461 = vmatmul.mubr.f32.gmra.mrb[0].mxu0 %v1169
  %v1462 = vpop.f32.mrb[0].mxu0
  %v1463 = vadd.f32 0.0, %v1462
  %v1464 = vpop.f32.mrb[0].mxu0
  %1465 = vmatprep.mubr.f32.mxu0 0.0
  %1466 = vmatmul.mubr.f32.gmra.mrb[0].mxu0 %v1172
  %v1467 = vpop.f32.mrb[0].mxu0
  %v1468 = vadd.f32 0.0, %v1467
  %v1469 = vpop.f32.mrb[0].mxu0
  %1470 = vmatprep.mubr.f32.mxu0 0.0
  %1471 = vmatmul.mubr.f32.gmra.mrb[0].mxu0 %v1175
  %v1472 = vpop.f32.mrb[0].mxu0
  %v1473 = vadd.f32 0.0, %v1472
  %v1474 = vpop.f32.mrb[0].mxu0
  %1475 = vmatprep.mubr.f32.mxu0 0.0
  %1476 = vmatmul.mubr.f32.gmra.mrb[0].mxu0 %v1178
  %v1477 = vpop.f32.mrb[0].mxu0
  %v1478 = vadd.f32 0.0, %v1477
  %v1479 = vpop.f32.mrb[0].mxu0
  %1480 = vmatprep.mubr.f32.mxu0 0.0
  %1481 = vmatmul.mubr.f32.gmra.mrb[0].mxu0 %v1181
  %v1482 = vpop.f32.mrb[0].mxu0
  %v1483 = vadd.f32 0.0, %v1482
  %v1484 = vpop.f32.mrb[0].mxu0
  %1485 = vmatprep.mubr.f32.mxu0 0.0
  %1486 = vmatmul.mubr.f32.gmra.mrb[0].mxu0 %v1184
  %v1487 = vpop.f32.mrb[0].mxu0
  %v1488 = vadd.f32 0.0, %v1487
  %v1489 = vpop.f32.mrb[0].mxu0
  %1490 = vmatprep.mubr.f32.mxu0 0.0
  %1491 = vmatmul.mubr.f32.gmra.mrb[0].mxu0 %v1187
  %v1492 = vpop.f32.mrb[0].mxu0
  %v1493 = vadd.f32 0.0, %v1492
  %v1494 = vpop.f32.mrb[0].mxu0
  %1495 = vmatprep.mubr.f32.mxu0 0.0
  %1496 = vmatmul.mubr.f32.gmra.mrb[0].mxu0 %v1190
  %v1497 = vpop.f32.mrb[0].mxu0
  %v1498 = vadd.f32 0.0, %v1497
  %v1499 = vpop.f32.mrb[0].mxu0
  %1500 = vmatprep.mubr.f32.mxu0 0.0
  %1501 = vmatmul.mubr.f32.gmra.mrb[0].mxu0 %v1193
  %v1502 = vpop.f32.mrb[0].mxu0
  %v1503 = vadd.f32 0.0, %v1502
  %v1504 = vpop.f32.mrb[0].mxu0
  %1505 = vmatprep.mubr.f32.mxu0 0.0
  %1506 = vmatmul.mubr.f32.gmra.mrb[0].mxu0 %v1196
  %v1507 = vpop.f32.mrb[0].mxu0
  %v1508 = vadd.f32 0.0, %v1507
  %v1509 = vpop.f32.mrb[0].mxu0
  %1510 = vmatprep.mubr.f32.mxu0 0.0
  %1511 = vmatmul.mubr.f32.gmra.mrb[0].mxu0 %v1199
  %v1512 = vpop.f32.mrb[0].mxu0
  %v1513 = vadd.f32 0.0, %v1512
  %v1514 = vpop.f32.mrb[0].mxu0
  %1515 = vmatprep.mubr.f32.mxu0 0.0
  %1516 = vmatmul.mubr.f32.gmra.mrb[0].mxu0 %v1202
  %v1517 = vpop.f32.mrb[0].mxu0
  %v1518 = vadd.f32 0.0, %v1517
  %v1519 = vpop.f32.mrb[0].mxu0
  %1520 = vmatprep.mubr.f32.mxu0 0.0
  %1521 = vmatmul.mubr.f32.gmra.mrb[0].mxu0 %v1205
  %v1522 = vpop.f32.mrb[0].mxu0
  %v1523 = vadd.f32 0.0, %v1522
  %v1524 = vpop.f32.mrb[0].mxu0
  %1525 = vmatprep.mubr.f32.mxu0 0.0
  %1526 = vmatmul.mubr.f32.gmra.mrb[0].mxu0 %v1208
  %v1527 = vpop.f32.mrb[0].mxu0
  %v1528 = vadd.f32 0.0, %v1527
  %v1529 = vpop.f32.mrb[0].mxu0
  %1530 = vmatprep.mubr.f32.mxu0 0.0
  %1531 = vmatmul.mubr.f32.gmra.mrb[0].mxu0 %v1211
  %v1532 = vpop.f32.mrb[0].mxu0
  %v1533 = vadd.f32 0.0, %v1532
  %v1534 = vpop.f32.mrb[0].mxu0
  %1535 = vmatprep.mubr.f32.mxu0 0.0
  %1536 = vmatmul.mubr.f32.gmra.mrb[0].mxu0 %v1214
  %v1537 = vpop.f32.mrb[0].mxu0
  %v1538 = vadd.f32 0.0, %v1537
  %v1539 = vpop.f32.mrb[0].mxu0
  %1540 = vmatprep.mubr.f32.mxu0 0.0
  %1541 = vmatmul.mubr.f32.gmra.mrb[0].mxu0 %v1217
  %v1542 = vpop.f32.mrb[0].mxu0
  %v1543 = vadd.f32 0.0, %v1542
  %v1544 = vpop.f32.mrb[0].mxu0
  %1545 = vmatprep.mubr.f32.mxu0 0.0
  %1546 = vmatmul.mubr.f32.gmra.mrb[0].mxu0 %v1220
  %v1547 = vpop.f32.mrb[0].mxu0
  %v1548 = vadd.f32 0.0, %v1547
  %v1549 = vpop.f32.mrb[0].mxu0
  %1550 = vmatprep.mubr.f32.mxu0 0.0
  %1551 = vmatmul.mubr.f32.gmra.mrb[0].mxu0 %v1223
  %v1552 = vpop.f32.mrb[0].mxu0
  %v1553 = vadd.f32 0.0, %v1552
  %v1554 = vpop.f32.mrb[0].mxu0
  %1555 = vmatprep.mubr.f32.mxu0 0.0
  %1556 = vmatmul.mubr.f32.gmra.mrb[0].mxu0 %v1226
  %v1557 = vpop.f32.mrb[0].mxu0
  %v1558 = vadd.f32 0.0, %v1557
  %v1559 = vpop.f32.mrb[0].mxu0
  %1560 = vmatprep.mubr.f32.mxu0 0.0
  %1561 = vmatmul.mubr.f32.gmra.mrb[0].mxu0 %v1229
  %v1562 = vpop.f32.mrb[0].mxu0
  %v1563 = vadd.f32 0.0, %v1562
  %v1564 = vpop.f32.mrb[0].mxu0
  %1565 = vmatprep.mubr.f32.mxu0 0.0
  %1566 = vmatmul.mubr.f32.gmra.mrb[0].mxu0 %v1232
  %v1567 = vpop.f32.mrb[0].mxu0
  %v1568 = vadd.f32 0.0, %v1567
  %v1569 = vpop.f32.mrb[0].mxu0
  %1570 = vmatprep.mubr.f32.mxu0 0.0
  %1571 = vmatmul.mubr.f32.gmra.mrb[0].mxu0 %v1235
  %v1572 = vpop.f32.mrb[0].mxu0
  %v1573 = vadd.f32 0.0, %v1572
  %v1574 = vpop.f32.mrb[0].mxu0
  %1575 = vmatprep.mubr.f32.mxu0 0.0
  %1576 = vmatmul.mubr.f32.gmra.mrb[0].mxu0 %v1238
  %v1577 = vpop.f32.mrb[0].mxu0
  %v1578 = vadd.f32 0.0, %v1577
  %v1579 = vpop.f32.mrb[0].mxu0
  %1580 = vmatprep.mubr.f32.mxu0 0.0
  %1581 = vmatmul.mubr.f32.gmra.mrb[0].mxu0 %v1241
  %v1582 = vpop.f32.mrb[0].mxu0
  %v1583 = vadd.f32 0.0, %v1582
  %v1584 = vpop.f32.mrb[0].mxu0
  %1585 = vmatprep.mubr.f32.mxu0 0.0
  %1586 = vmatmul.mubr.f32.gmra.mrb[0].mxu0 %v1244
  %v1587 = vpop.f32.mrb[0].mxu0
  %v1588 = vadd.f32 0.0, %v1587
  %v1589 = vpop.f32.mrb[0].mxu0
  %1590 = vmatprep.mubr.f32.mxu0 0.0
  %1591 = vmatmul.mubr.f32.gmra.mrb[0].mxu0 %v1247
  %v1592 = vpop.f32.mrb[0].mxu0
  %v1593 = vadd.f32 0.0, %v1592
  %v1594 = vpop.f32.mrb[0].mxu0
  %1595 = vmatprep.mubr.f32.mxu0 0.0
  %1596 = vmatmul.mubr.f32.gmra.mrb[0].mxu0 %v1250
  %v1597 = vpop.f32.mrb[0].mxu0
  %v1598 = vadd.f32 0.0, %v1597
  %v1599 = vpop.f32.mrb[0].mxu0
  %1600 = vmatprep.mubr.f32.mxu0 0.0
  %1601 = vmatmul.mubr.f32.gmra.mrb[0].mxu0 %v1253
  %v1602 = vpop.f32.mrb[0].mxu0
  %v1603 = vadd.f32 0.0, %v1602
  %v1604 = vpop.f32.mrb[0].mxu0
  %1605 = vmatprep.mubr.f32.mxu0 0.0
  %1606 = vmatmul.mubr.f32.gmra.mrb[0].mxu0 %v1256
  %v1607 = vpop.f32.mrb[0].mxu0
  %v1608 = vadd.f32 0.0, %v1607
  %v1609 = vpop.f32.mrb[0].mxu0
  %1610 = vmatprep.mubr.f32.mxu0 0.0
  %1611 = vmatmul.mubr.f32.gmra.mrb[0].mxu0 %v1259
  %v1612 = vpop.f32.mrb[0].mxu0
  %v1613 = vadd.f32 0.0, %v1612
  %v1614 = vpop.f32.mrb[0].mxu0
  %1615 = vmatprep.mubr.f32.mxu0 0.0
  %1616 = vmatmul.mubr.f32.gmra.mrb[0].mxu0 %v1262
  %v1617 = vpop.f32.mrb[0].mxu0
  %v1618 = vadd.f32 0.0, %v1617
  %v1619 = vpop.f32.mrb[0].mxu0
  %1620 = vmatprep.mubr.f32.mxu0 0.0
  %1621 = vmatmul.mubr.f32.gmra.mrb[0].mxu0 %v1265
  %v1622 = vpop.f32.mrb[0].mxu0
  %v1623 = vadd.f32 0.0, %v1622
  %v1624 = vpop.f32.mrb[0].mxu0
  %1625 = vmatprep.mubr.f32.mxu0 0.0
  %1626 = vmatmul.mubr.f32.gmra.mrb[0].mxu0 %v1268
  %v1627 = vpop.f32.mrb[0].mxu0
  %v1628 = vadd.f32 0.0, %v1627
  %v1629 = vpop.f32.mrb[0].mxu0
  %1630 = vmatprep.mubr.f32.mxu0 0.0
  %1631 = vmatmul.mubr.f32.gmra.mrb[0].mxu0 %v1271
  %v1632 = vpop.f32.mrb[0].mxu0
  %v1633 = vadd.f32 0.0, %v1632
  %v1634 = vpop.f32.mrb[0].mxu0
  %1635 = vmatprep.mubr.f32.mxu0 0.0
  %1636 = vmatmul.mubr.f32.gmra.mrb[0].mxu0 %v1274
  %v1637 = vpop.f32.mrb[0].mxu0
  %v1638 = vadd.f32 0.0, %v1637
  %v1639 = vpop.f32.mrb[0].mxu0
  %1640 = vmatprep.mubr.f32.mxu0 0.0
  %1641 = vmatmul.mubr.f32.gmra.mrb[0].mxu0 %v1277
  %v1642 = vpop.f32.mrb[0].mxu0
  %v1643 = vadd.f32 0.0, %v1642
  %v1644 = vpop.f32.mrb[0].mxu0
  %1645 = vmatprep.mubr.f32.mxu0 0.0
  %1646 = vmatmul.mubr.f32.gmra.mrb[0].mxu0 %v1280
  %v1647 = vpop.f32.mrb[0].mxu0
  %v1648 = vadd.f32 0.0, %v1647
  %v1649 = vpop.f32.mrb[0].mxu0
  %1650 = vmatprep.mubr.f32.mxu0 0.0
  %1651 = vmatmul.mubr.f32.gmra.mrb[0].mxu0 %v1283
  %v1652 = vpop.f32.mrb[0].mxu0
  %v1653 = vadd.f32 0.0, %v1652
  %v1654 = vpop.f32.mrb[0].mxu0
  %1655 = vmatprep.mubr.f32.mxu0 0.0
  %1656 = vmatmul.mubr.f32.gmra.mrb[0].mxu0 %v1286
  %v1657 = vpop.f32.mrb[0].mxu0
  %v1658 = vadd.f32 0.0, %v1657
  %v1659 = vpop.f32.mrb[0].mxu0
  %1660 = vmatprep.mubr.f32.mxu0 0.0
  %1661 = vmatmul.mubr.f32.gmra.mrb[0].mxu0 %v1289
  %v1662 = vpop.f32.mrb[0].mxu0
  %v1663 = vadd.f32 0.0, %v1662
  %v1664 = vpop.f32.mrb[0].mxu0
  %1665 = vmatprep.mubr.f32.mxu0 0.0
  %1666 = vmatmul.mubr.f32.gmra.mrb[0].mxu0 %v1292
  %v1667 = vpop.f32.mrb[0].mxu0
  %v1668 = vadd.f32 0.0, %v1667
  %v1669 = vpop.f32.mrb[0].mxu0
  %1670 = vmatprep.mubr.f32.mxu0 0.0
  %1671 = vmatmul.mubr.f32.gmra.mrb[0].mxu0 %v1295
  %v1672 = vpop.f32.mrb[0].mxu0
  %v1673 = vadd.f32 0.0, %v1672
  %v1674 = vpop.f32.mrb[0].mxu0
  %1675 = vmatprep.mubr.f32.mxu0 0.0
  %1676 = vmatmul.mubr.f32.gmra.mrb[0].mxu0 %v1298
  %v1677 = vpop.f32.mrb[0].mxu0
  %v1678 = vadd.f32 0.0, %v1677
  %v1679 = vpop.f32.mrb[0].mxu0
  %1680 = vmatprep.mubr.f32.mxu0 0.0
  %1681 = vmatmul.mubr.f32.gmra.mrb[0].mxu0 %v1301
  %v1682 = vpop.f32.mrb[0].mxu0
  %v1683 = vadd.f32 0.0, %v1682
  %v1684 = vpop.f32.mrb[0].mxu0
  %1685 = vmatprep.mubr.f32.mxu0 0.0
  %1686 = vmatmul.mubr.f32.gmra.mrb[0].mxu0 %v1304
  %v1687 = vpop.f32.mrb[0].mxu0
  %v1688 = vadd.f32 0.0, %v1687
  %v1689 = vpop.f32.mrb[0].mxu0
  %1690 = vdwg.mxu0
  %v1691 = vmax.f32 %v1373, 0.0
  %v1692 = vmax.f32 %v1378, 0.0
  %v1693 = vmax.f32 %v1383, 0.0
  %v1694 = vmax.f32 %v1388, 0.0
  %v1695 = vmax.f32 %v1393, 0.0
  %v1696 = vmax.f32 %v1398, 0.0
  %v1697 = vmax.f32 %v1403, 0.0
  %v1698 = vmax.f32 %v1408, 0.0
  %v1699 = vmax.f32 %v1413, 0.0
  %v1700 = vmax.f32 %v1418, 0.0
  %v1701 = vmax.f32 %v1423, 0.0
  %v1702 = vmax.f32 %v1428, 0.0
  %v1703 = vmax.f32 %v1433, 0.0
  %v1704 = vmax.f32 %v1438, 0.0
  %v1705 = vmax.f32 %v1443, 0.0
  %v1706 = vmax.f32 %v1448, 0.0
  %v1707 = vmax.f32 %v1453, 0.0
  %v1708 = vmax.f32 %v1458, 0.0
  %v1709 = vmax.f32 %v1463, 0.0
  %v1710 = vmax.f32 %v1468, 0.0
  %v1711 = vmax.f32 %v1473, 0.0
  %v1712 = vmax.f32 %v1478, 0.0
  %v1713 = vmax.f32 %v1483, 0.0
  %v1714 = vmax.f32 %v1488, 0.0
  %v1715 = vmax.f32 %v1493, 0.0
  %v1716 = vmax.f32 %v1498, 0.0
  %v1717 = vmax.f32 %v1503, 0.0
  %v1718 = vmax.f32 %v1508, 0.0
  %v1719 = vmax.f32 %v1513, 0.0
  %v1720 = vmax.f32 %v1518, 0.0
  %v1721 = vmax.f32 %v1523, 0.0
  %v1722 = vmax.f32 %v1528, 0.0
  %v1723 = vmax.f32 %v1533, 0.0
  %v1724 = vmax.f32 %v1538, 0.0
  %v1725 = vmax.f32 %v1543, 0.0
  %v1726 = vmax.f32 %v1548, 0.0
  %v1727 = vmax.f32 %v1553, 0.0
  %v1728 = vmax.f32 %v1558, 0.0
  %v1729 = vmax.f32 %v1563, 0.0
  %v1730 = vmax.f32 %v1568, 0.0
  %v1731 = vmax.f32 %v1573, 0.0
  %v1732 = vmax.f32 %v1578, 0.0
  %v1733 = vmax.f32 %v1583, 0.0
  %v1734 = vmax.f32 %v1588, 0.0
  %v1735 = vmax.f32 %v1593, 0.0
  %v1736 = vmax.f32 %v1598, 0.0
  %v1737 = vmax.f32 %v1603, 0.0
  %v1738 = vmax.f32 %v1608, 0.0
  %v1739 = vmax.f32 %v1613, 0.0
  %v1740 = vmax.f32 %v1618, 0.0
  %v1741 = vmax.f32 %v1623, 0.0
  %v1742 = vmax.f32 %v1628, 0.0
  %v1743 = vmax.f32 %v1633, 0.0
  %v1744 = vmax.f32 %v1638, 0.0
  %v1745 = vmax.f32 %v1643, 0.0
  %v1746 = vmax.f32 %v1648, 0.0
  %v1747 = vmax.f32 %v1653, 0.0
  %v1748 = vmax.f32 %v1658, 0.0
  %v1749 = vmax.f32 %v1663, 0.0
  %v1750 = vmax.f32 %v1668, 0.0
  %v1751 = vmax.f32 %v1673, 0.0
  %v1752 = vmax.f32 %v1678, 0.0
  %v1753 = vmax.f32 %v1683, 0.0
  %v1754 = vmax.f32 %v1688, 0.0
  %v1755 = vrot.slane %v1691, 1
  %v1756 = vrot.slane %v1692, 1
  %v1757 = vrot.slane %v1693, 1
  %v1758 = vrot.slane %v1694, 1
  %v1759 = vrot.slane %v1695, 1
  %v1760 = vrot.slane %v1696, 1
  %v1761 = vrot.slane %v1697, 1
  %v1762 = vrot.slane %v1698, 1
  %v1763 = vrot.slane %v1699, 1
  %v1764 = vrot.slane %v1700, 1
  %v1765 = vrot.slane %v1701, 1
  %v1766 = vrot.slane %v1702, 1
  %v1767 = vrot.slane %v1703, 1
  %v1768 = vrot.slane %v1704, 1
  %v1769 = vrot.slane %v1705, 1
  %v1770 = vrot.slane %v1706, 1
  %v1771 = vrot.slane %v1707, 1
  %v1772 = vrot.slane %v1708, 1
  %v1773 = vrot.slane %v1709, 1
  %v1774 = vrot.slane %v1710, 1
  %v1775 = vrot.slane %v1711, 1
  %v1776 = vrot.slane %v1712, 1
  %v1777 = vrot.slane %v1713, 1
  %v1778 = vrot.slane %v1714, 1
  %v1779 = vrot.slane %v1715, 1
  %v1780 = vrot.slane %v1716, 1
  %v1781 = vrot.slane %v1717, 1
  %v1782 = vrot.slane %v1718, 1
  %v1783 = vrot.slane %v1719, 1
  %v1784 = vrot.slane %v1720, 1
  %v1785 = vrot.slane %v1721, 1
  %v1786 = vrot.slane %v1722, 1
  %v1787 = vrot.slane %v1723, 1
  %v1788 = vrot.slane %v1724, 1
  %v1789 = vrot.slane %v1725, 1
  %v1790 = vrot.slane %v1726, 1
  %v1791 = vrot.slane %v1727, 1
  %v1792 = vrot.slane %v1728, 1
  %v1793 = vrot.slane %v1729, 1
  %v1794 = vrot.slane %v1730, 1
  %v1795 = vrot.slane %v1731, 1
  %v1796 = vrot.slane %v1732, 1
  %v1797 = vrot.slane %v1733, 1
  %v1798 = vrot.slane %v1734, 1
  %v1799 = vrot.slane %v1735, 1
  %v1800 = vrot.slane %v1736, 1
  %v1801 = vrot.slane %v1737, 1
  %v1802 = vrot.slane %v1738, 1
  %v1803 = vrot.slane %v1739, 1
  %v1804 = vrot.slane %v1740, 1
  %v1805 = vrot.slane %v1741, 1
  %v1806 = vrot.slane %v1742, 1
  %v1807 = vrot.slane %v1743, 1
  %v1808 = vrot.slane %v1744, 1
  %v1809 = vrot.slane %v1745, 1
  %v1810 = vrot.slane %v1746, 1
  %v1811 = vrot.slane %v1747, 1
  %v1812 = vrot.slane %v1748, 1
  %v1813 = vrot.slane %v1749, 1
  %v1814 = vrot.slane %v1750, 1
  %v1815 = vrot.slane %v1751, 1
  %v1816 = vrot.slane %v1752, 1
  %v1817 = vrot.slane %v1753, 1
  %v1818 = vrot.slane %v1754, 1
  %v1819 = vsel %vm147, %v1817, %v1818
  %v1820 = vsel %vm147, %v1816, %v1817
  %v1821 = vsel %vm147, %v1815, %v1816
  %v1822 = vsel %vm147, %v1814, %v1815
  %v1823 = vsel %vm147, %v1813, %v1814
  %v1824 = vsel %vm147, %v1812, %v1813
  %v1825 = vsel %vm147, %v1811, %v1812
  %v1826 = vsel %vm147, %v1810, %v1811
  %v1827 = vsel %vm147, %v1809, %v1810
  %v1828 = vsel %vm147, %v1808, %v1809
  %v1829 = vsel %vm147, %v1807, %v1808
  %v1830 = vsel %vm147, %v1806, %v1807
  %v1831 = vsel %vm147, %v1805, %v1806
  %v1832 = vsel %vm147, %v1804, %v1805
  %v1833 = vsel %vm147, %v1803, %v1804
  %v1834 = vsel %vm147, %v1802, %v1803
  %v1835 = vsel %vm147, %v1801, %v1802
  %v1836 = vsel %vm147, %v1800, %v1801
  %v1837 = vsel %vm147, %v1799, %v1800
  %v1838 = vsel %vm147, %v1798, %v1799
  %v1839 = vsel %vm147, %v1797, %v1798
  %v1840 = vsel %vm147, %v1796, %v1797
  %v1841 = vsel %vm147, %v1795, %v1796
  %v1842 = vsel %vm147, %v1794, %v1795
  %v1843 = vsel %vm147, %v1793, %v1794
  %v1844 = vsel %vm147, %v1792, %v1793
  %v1845 = vsel %vm147, %v1791, %v1792
  %v1846 = vsel %vm147, %v1790, %v1791
  %v1847 = vsel %vm147, %v1789, %v1790
  %v1848 = vsel %vm147, %v1788, %v1789
  %v1849 = vsel %vm147, %v1787, %v1788
  %v1850 = vsel %vm147, %v1786, %v1787
  %v1851 = vsel %vm147, %v1785, %v1786
  %v1852 = vsel %vm147, %v1784, %v1785
  %v1853 = vsel %vm147, %v1783, %v1784
  %v1854 = vsel %vm147, %v1782, %v1783
  %v1855 = vsel %vm147, %v1781, %v1782
  %v1856 = vsel %vm147, %v1780, %v1781
  %v1857 = vsel %vm147, %v1779, %v1780
  %v1858 = vsel %vm147, %v1778, %v1779
  %v1859 = vsel %vm147, %v1777, %v1778
  %v1860 = vsel %vm147, %v1776, %v1777
  %v1861 = vsel %vm147, %v1775, %v1776
  %v1862 = vsel %vm147, %v1774, %v1775
  %v1863 = vsel %vm147, %v1773, %v1774
  %v1864 = vsel %vm147, %v1772, %v1773
  %v1865 = vsel %vm147, %v1771, %v1772
  %v1866 = vsel %vm147, %v1770, %v1771
  %v1867 = vsel %vm147, %v1769, %v1770
  %v1868 = vsel %vm147, %v1768, %v1769
  %v1869 = vsel %vm147, %v1767, %v1768
  %v1870 = vsel %vm147, %v1766, %v1767
  %v1871 = vsel %vm147, %v1765, %v1766
  %v1872 = vsel %vm147, %v1764, %v1765
  %v1873 = vsel %vm147, %v1763, %v1764
  %v1874 = vsel %vm147, %v1762, %v1763
  %v1875 = vsel %vm147, %v1761, %v1762
  %v1876 = vsel %vm147, %v1760, %v1761
  %v1877 = vsel %vm147, %v1759, %v1760
  %v1878 = vsel %vm147, %v1758, %v1759
  %v1879 = vsel %vm147, %v1757, %v1758
  %v1880 = vsel %vm147, %v1756, %v1757
  %v1881 = vsel %vm147, %v1755, %v1756
  %v1882 = vsel %vm147, %v1818, %v1755
  %1947 = vrot.lane.b32.xlu0 %v1881, 4
  %v1948 = vpop.permute.xlu0 %1947
  %1949 = vrot.lane.b32.xlu0 %v1880, 4
  %v1950 = vpop.permute.xlu0 %1949
  %1951 = vrot.lane.b32.xlu0 %v1879, 4
  %v1952 = vpop.permute.xlu0 %1951
  %1953 = vrot.lane.b32.xlu0 %v1878, 4
  %v1954 = vpop.permute.xlu0 %1953
  %1955 = vrot.lane.b32.xlu0 %v1877, 4
  %v1956 = vpop.permute.xlu0 %1955
  %1957 = vrot.lane.b32.xlu0 %v1876, 4
  %v1958 = vpop.permute.xlu0 %1957
  %1959 = vrot.lane.b32.xlu0 %v1875, 4
  %v1960 = vpop.permute.xlu0 %1959
  %1961 = vrot.lane.b32.xlu0 %v1874, 4
  %v1962 = vpop.permute.xlu0 %1961
  %1963 = vrot.lane.b32.xlu0 %v1873, 4
  %v1964 = vpop.permute.xlu0 %1963
  %1965 = vrot.lane.b32.xlu0 %v1872, 4
  %v1966 = vpop.permute.xlu0 %1965
  %1967 = vrot.lane.b32.xlu0 %v1871, 4
  %v1968 = vpop.permute.xlu0 %1967
  %1969 = vrot.lane.b32.xlu0 %v1870, 4
  %v1970 = vpop.permute.xlu0 %1969
  %1971 = vrot.lane.b32.xlu0 %v1869, 4
  %v1972 = vpop.permute.xlu0 %1971
  %1973 = vrot.lane.b32.xlu0 %v1868, 4
  %v1974 = vpop.permute.xlu0 %1973
  %1975 = vrot.lane.b32.xlu0 %v1867, 4
  %v1976 = vpop.permute.xlu0 %1975
  %1977 = vrot.lane.b32.xlu0 %v1866, 4
  %v1978 = vpop.permute.xlu0 %1977
  %1979 = vrot.lane.b32.xlu0 %v1865, 4
  %v1980 = vpop.permute.xlu0 %1979
  %1981 = vrot.lane.b32.xlu0 %v1864, 4
  %v1982 = vpop.permute.xlu0 %1981
  %1983 = vrot.lane.b32.xlu0 %v1863, 4
  %v1984 = vpop.permute.xlu0 %1983
  %1985 = vrot.lane.b32.xlu0 %v1862, 4
  %v1986 = vpop.permute.xlu0 %1985
  %1987 = vrot.lane.b32.xlu0 %v1861, 4
  %v1988 = vpop.permute.xlu0 %1987
  %1989 = vrot.lane.b32.xlu0 %v1860, 4
  %v1990 = vpop.permute.xlu0 %1989
  %1991 = vrot.lane.b32.xlu0 %v1859, 4
  %v1992 = vpop.permute.xlu0 %1991
  %1993 = vrot.lane.b32.xlu0 %v1858, 4
  %v1994 = vpop.permute.xlu0 %1993
  %1995 = vrot.lane.b32.xlu0 %v1857, 4
  %v1996 = vpop.permute.xlu0 %1995
  %1997 = vrot.lane.b32.xlu0 %v1856, 4
  %v1998 = vpop.permute.xlu0 %1997
  %1999 = vrot.lane.b32.xlu0 %v1855, 4
  %v2000 = vpop.permute.xlu0 %1999
  %2001 = vrot.lane.b32.xlu0 %v1854, 4
  %v2002 = vpop.permute.xlu0 %2001
  %2003 = vrot.lane.b32.xlu0 %v1853, 4
  %v2004 = vpop.permute.xlu0 %2003
  %2005 = vrot.lane.b32.xlu0 %v1852, 4
  %v2006 = vpop.permute.xlu0 %2005
  %2007 = vrot.lane.b32.xlu0 %v1851, 4
  %v2008 = vpop.permute.xlu0 %2007
  %2009 = vrot.lane.b32.xlu0 %v1850, 4
  %v2010 = vpop.permute.xlu0 %2009
  %2011 = vrot.lane.b32.xlu0 %v1849, 4
  %v2012 = vpop.permute.xlu0 %2011
  %2013 = vrot.lane.b32.xlu0 %v1848, 4
  %v2014 = vpop.permute.xlu0 %2013
  %2015 = vrot.lane.b32.xlu0 %v1847, 4
  %v2016 = vpop.permute.xlu0 %2015
  %2017 = vrot.lane.b32.xlu0 %v1846, 4
  %v2018 = vpop.permute.xlu0 %2017
  %2019 = vrot.lane.b32.xlu0 %v1845, 4
  %v2020 = vpop.permute.xlu0 %2019
  %2021 = vrot.lane.b32.xlu0 %v1844, 4
  %v2022 = vpop.permute.xlu0 %2021
  %2023 = vrot.lane.b32.xlu0 %v1843, 4
  %v2024 = vpop.permute.xlu0 %2023
  %2025 = vrot.lane.b32.xlu0 %v1842, 4
  %v2026 = vpop.permute.xlu0 %2025
  %2027 = vrot.lane.b32.xlu0 %v1841, 4
  %v2028 = vpop.permute.xlu0 %2027
  %2029 = vrot.lane.b32.xlu0 %v1840, 4
  %v2030 = vpop.permute.xlu0 %2029
  %2031 = vrot.lane.b32.xlu0 %v1839, 4
  %v2032 = vpop.permute.xlu0 %2031
  %2033 = vrot.lane.b32.xlu0 %v1838, 4
  %v2034 = vpop.permute.xlu0 %2033
  %2035 = vrot.lane.b32.xlu0 %v1837, 4
  %v2036 = vpop.permute.xlu0 %2035
  %2037 = vrot.lane.b32.xlu0 %v1836, 4
  %v2038 = vpop.permute.xlu0 %2037
  %2039 = vrot.lane.b32.xlu0 %v1835, 4
  %v2040 = vpop.permute.xlu0 %2039
  %2041 = vrot.lane.b32.xlu0 %v1834, 4
  %v2042 = vpop.permute.xlu0 %2041
  %2043 = vrot.lane.b32.xlu0 %v1833, 4
  %v2044 = vpop.permute.xlu0 %2043
  %2045 = vrot.lane.b32.xlu0 %v1832, 4
  %v2046 = vpop.permute.xlu0 %2045
  %2047 = vrot.lane.b32.xlu0 %v1831, 4
  %v2048 = vpop.permute.xlu0 %2047
  %2049 = vrot.lane.b32.xlu0 %v1830, 4
  %v2050 = vpop.permute.xlu0 %2049
  %2051 = vrot.lane.b32.xlu0 %v1829, 4
  %v2052 = vpop.permute.xlu0 %2051
  %2053 = vrot.lane.b32.xlu0 %v1828, 4
  %v2054 = vpop.permute.xlu0 %2053
  %2055 = vrot.lane.b32.xlu0 %v1827, 4
  %v2056 = vpop.permute.xlu0 %2055
  %2057 = vrot.lane.b32.xlu0 %v1826, 4
  %v2058 = vpop.permute.xlu0 %2057
  %2059 = vrot.lane.b32.xlu0 %v1825, 4
  %v2060 = vpop.permute.xlu0 %2059
  %2061 = vrot.lane.b32.xlu0 %v1824, 4
  %v2062 = vpop.permute.xlu0 %2061
  %2063 = vrot.lane.b32.xlu0 %v1823, 4
  %v2064 = vpop.permute.xlu0 %2063
  %2065 = vrot.lane.b32.xlu0 %v1822, 4
  %v2066 = vpop.permute.xlu0 %2065
  %2067 = vrot.lane.b32.xlu0 %v1821, 4
  %v2068 = vpop.permute.xlu0 %2067
  %2069 = vrot.lane.b32.xlu0 %v1820, 4
  %v2070 = vpop.permute.xlu0 %2069
  %2071 = vrot.lane.b32.xlu0 %v1819, 4
  %v2072 = vpop.permute.xlu0 %2071
  %2073 = vrot.lane.b32.xlu0 %v1882, 4
  %v2074 = vpop.permute.xlu0 %2073
  %2203 = vrot.lane.b32.xlu0 %v1693, 8
  %v2204 = vpop.permute.xlu0 %2203
  %2205 = vrot.lane.b32.xlu0 %v1694, 8
  %v2206 = vpop.permute.xlu0 %2205
  %2207 = vrot.lane.b32.xlu0 %v1695, 8
  %v2208 = vpop.permute.xlu0 %2207
  %2209 = vrot.lane.b32.xlu0 %v1696, 8
  %v2210 = vpop.permute.xlu0 %2209
  %2211 = vrot.lane.b32.xlu0 %v1697, 8
  %v2212 = vpop.permute.xlu0 %2211
  %2213 = vrot.lane.b32.xlu0 %v1698, 8
  %v2214 = vpop.permute.xlu0 %2213
  %2215 = vrot.lane.b32.xlu0 %v1699, 8
  %v2216 = vpop.permute.xlu0 %2215
  %2217 = vrot.lane.b32.xlu0 %v1700, 8
  %v2218 = vpop.permute.xlu0 %2217
  %2219 = vrot.lane.b32.xlu0 %v1701, 8
  %v2220 = vpop.permute.xlu0 %2219
  %2221 = vrot.lane.b32.xlu0 %v1702, 8
  %v2222 = vpop.permute.xlu0 %2221
  %2223 = vrot.lane.b32.xlu0 %v1703, 8
  %v2224 = vpop.permute.xlu0 %2223
  %2225 = vrot.lane.b32.xlu0 %v1704, 8
  %v2226 = vpop.permute.xlu0 %2225
  %2227 = vrot.lane.b32.xlu0 %v1705, 8
  %v2228 = vpop.permute.xlu0 %2227
  %2229 = vrot.lane.b32.xlu0 %v1706, 8
  %v2230 = vpop.permute.xlu0 %2229
  %2231 = vrot.lane.b32.xlu0 %v1707, 8
  %v2232 = vpop.permute.xlu0 %2231
  %2233 = vrot.lane.b32.xlu0 %v1708, 8
  %v2234 = vpop.permute.xlu0 %2233
  %2235 = vrot.lane.b32.xlu0 %v1709, 8
  %v2236 = vpop.permute.xlu0 %2235
  %2237 = vrot.lane.b32.xlu0 %v1710, 8
  %v2238 = vpop.permute.xlu0 %2237
  %2239 = vrot.lane.b32.xlu0 %v1711, 8
  %v2240 = vpop.permute.xlu0 %2239
  %2241 = vrot.lane.b32.xlu0 %v1712, 8
  %v2242 = vpop.permute.xlu0 %2241
  %2243 = vrot.lane.b32.xlu0 %v1713, 8
  %v2244 = vpop.permute.xlu0 %2243
  %2245 = vrot.lane.b32.xlu0 %v1714, 8
  %v2246 = vpop.permute.xlu0 %2245
  %2247 = vrot.lane.b32.xlu0 %v1715, 8
  %v2248 = vpop.permute.xlu0 %2247
  %2249 = vrot.lane.b32.xlu0 %v1716, 8
  %v2250 = vpop.permute.xlu0 %2249
  %2251 = vrot.lane.b32.xlu0 %v1717, 8
  %v2252 = vpop.permute.xlu0 %2251
  %2253 = vrot.lane.b32.xlu0 %v1718, 8
  %v2254 = vpop.permute.xlu0 %2253
  %2255 = vrot.lane.b32.xlu0 %v1719, 8
  %v2256 = vpop.permute.xlu0 %2255
  %2257 = vrot.lane.b32.xlu0 %v1720, 8
  %v2258 = vpop.permute.xlu0 %2257
  %2259 = vrot.lane.b32.xlu0 %v1721, 8
  %v2260 = vpop.permute.xlu0 %2259
  %2261 = vrot.lane.b32.xlu0 %v1722, 8
  %v2262 = vpop.permute.xlu0 %2261
  %2263 = vrot.lane.b32.xlu0 %v1723, 8
  %v2264 = vpop.permute.xlu0 %2263
  %2265 = vrot.lane.b32.xlu0 %v1724, 8
  %v2266 = vpop.permute.xlu0 %2265
  %2267 = vrot.lane.b32.xlu0 %v1725, 8
  %v2268 = vpop.permute.xlu0 %2267
  %2269 = vrot.lane.b32.xlu0 %v1726, 8
  %v2270 = vpop.permute.xlu0 %2269
  %2271 = vrot.lane.b32.xlu0 %v1727, 8
  %v2272 = vpop.permute.xlu0 %2271
  %2273 = vrot.lane.b32.xlu0 %v1728, 8
  %v2274 = vpop.permute.xlu0 %2273
  %2275 = vrot.lane.b32.xlu0 %v1729, 8
  %v2276 = vpop.permute.xlu0 %2275
  %2277 = vrot.lane.b32.xlu0 %v1730, 8
  %v2278 = vpop.permute.xlu0 %2277
  %2279 = vrot.lane.b32.xlu0 %v1731, 8
  %v2280 = vpop.permute.xlu0 %2279
  %2281 = vrot.lane.b32.xlu0 %v1732, 8
  %v2282 = vpop.permute.xlu0 %2281
  %2283 = vrot.lane.b32.xlu0 %v1733, 8
  %v2284 = vpop.permute.xlu0 %2283
  %2285 = vrot.lane.b32.xlu0 %v1734, 8
  %v2286 = vpop.permute.xlu0 %2285
  %2287 = vrot.lane.b32.xlu0 %v1735, 8
  %v2288 = vpop.permute.xlu0 %2287
  %2289 = vrot.lane.b32.xlu0 %v1736, 8
  %v2290 = vpop.permute.xlu0 %2289
  %2291 = vrot.lane.b32.xlu0 %v1737, 8
  %v2292 = vpop.permute.xlu0 %2291
  %2293 = vrot.lane.b32.xlu0 %v1738, 8
  %v2294 = vpop.permute.xlu0 %2293
  %2295 = vrot.lane.b32.xlu0 %v1739, 8
  %v2296 = vpop.permute.xlu0 %2295
  %2297 = vrot.lane.b32.xlu0 %v1740, 8
  %v2298 = vpop.permute.xlu0 %2297
  %2299 = vrot.lane.b32.xlu0 %v1741, 8
  %v2300 = vpop.permute.xlu0 %2299
  %2301 = vrot.lane.b32.xlu0 %v1742, 8
  %v2302 = vpop.permute.xlu0 %2301
  %2303 = vrot.lane.b32.xlu0 %v1743, 8
  %v2304 = vpop.permute.xlu0 %2303
  %2305 = vrot.lane.b32.xlu0 %v1744, 8
  %v2306 = vpop.permute.xlu0 %2305
  %2307 = vrot.lane.b32.xlu0 %v1745, 8
  %v2308 = vpop.permute.xlu0 %2307
  %2309 = vrot.lane.b32.xlu0 %v1746, 8
  %v2310 = vpop.permute.xlu0 %2309
  %2311 = vrot.lane.b32.xlu0 %v1747, 8
  %v2312 = vpop.permute.xlu0 %2311
  %2313 = vrot.lane.b32.xlu0 %v1748, 8
  %v2314 = vpop.permute.xlu0 %2313
  %2315 = vrot.lane.b32.xlu0 %v1749, 8
  %v2316 = vpop.permute.xlu0 %2315
  %2317 = vrot.lane.b32.xlu0 %v1750, 8
  %v2318 = vpop.permute.xlu0 %2317
  %2319 = vrot.lane.b32.xlu0 %v1751, 8
  %v2320 = vpop.permute.xlu0 %2319
  %2321 = vrot.lane.b32.xlu0 %v1752, 8
  %v2322 = vpop.permute.xlu0 %2321
  %2323 = vrot.lane.b32.xlu0 %v1753, 8
  %v2324 = vpop.permute.xlu0 %2323
  %2325 = vrot.lane.b32.xlu0 %v1754, 8
  %v2326 = vpop.permute.xlu0 %2325
  %2327 = vrot.lane.b32.xlu0 %v1691, 8
  %v2328 = vpop.permute.xlu0 %2327
  %2329 = vrot.lane.b32.xlu0 %v1692, 8
  %v2330 = vpop.permute.xlu0 %2329
  %2395 = vrot.lane.b32.xlu0 %v1879, 12
  %v2396 = vpop.permute.xlu0 %2395
  %2397 = vrot.lane.b32.xlu0 %v1878, 12
  %v2398 = vpop.permute.xlu0 %2397
  %2399 = vrot.lane.b32.xlu0 %v1877, 12
  %v2400 = vpop.permute.xlu0 %2399
  %2401 = vrot.lane.b32.xlu0 %v1876, 12
  %v2402 = vpop.permute.xlu0 %2401
  %2403 = vrot.lane.b32.xlu0 %v1875, 12
  %v2404 = vpop.permute.xlu0 %2403
  %2405 = vrot.lane.b32.xlu0 %v1874, 12
  %v2406 = vpop.permute.xlu0 %2405
  %2407 = vrot.lane.b32.xlu0 %v1873, 12
  %v2408 = vpop.permute.xlu0 %2407
  %2409 = vrot.lane.b32.xlu0 %v1872, 12
  %v2410 = vpop.permute.xlu0 %2409
  %2411 = vrot.lane.b32.xlu0 %v1871, 12
  %v2412 = vpop.permute.xlu0 %2411
  %2413 = vrot.lane.b32.xlu0 %v1870, 12
  %v2414 = vpop.permute.xlu0 %2413
  %2415 = vrot.lane.b32.xlu0 %v1869, 12
  %v2416 = vpop.permute.xlu0 %2415
  %2417 = vrot.lane.b32.xlu0 %v1868, 12
  %v2418 = vpop.permute.xlu0 %2417
  %2419 = vrot.lane.b32.xlu0 %v1867, 12
  %v2420 = vpop.permute.xlu0 %2419
  %2421 = vrot.lane.b32.xlu0 %v1866, 12
  %v2422 = vpop.permute.xlu0 %2421
  %2423 = vrot.lane.b32.xlu0 %v1865, 12
  %v2424 = vpop.permute.xlu0 %2423
  %2425 = vrot.lane.b32.xlu0 %v1864, 12
  %v2426 = vpop.permute.xlu0 %2425
  %2427 = vrot.lane.b32.xlu0 %v1863, 12
  %v2428 = vpop.permute.xlu0 %2427
  %2429 = vrot.lane.b32.xlu0 %v1862, 12
  %v2430 = vpop.permute.xlu0 %2429
  %2431 = vrot.lane.b32.xlu0 %v1861, 12
  %v2432 = vpop.permute.xlu0 %2431
  %2433 = vrot.lane.b32.xlu0 %v1860, 12
  %v2434 = vpop.permute.xlu0 %2433
  %2435 = vrot.lane.b32.xlu0 %v1859, 12
  %v2436 = vpop.permute.xlu0 %2435
  %2437 = vrot.lane.b32.xlu0 %v1858, 12
  %v2438 = vpop.permute.xlu0 %2437
  %2439 = vrot.lane.b32.xlu0 %v1857, 12
  %v2440 = vpop.permute.xlu0 %2439
  %2441 = vrot.lane.b32.xlu0 %v1856, 12
  %v2442 = vpop.permute.xlu0 %2441
  %2443 = vrot.lane.b32.xlu0 %v1855, 12
  %v2444 = vpop.permute.xlu0 %2443
  %2445 = vrot.lane.b32.xlu0 %v1854, 12
  %v2446 = vpop.permute.xlu0 %2445
  %2447 = vrot.lane.b32.xlu0 %v1853, 12
  %v2448 = vpop.permute.xlu0 %2447
  %2449 = vrot.lane.b32.xlu0 %v1852, 12
  %v2450 = vpop.permute.xlu0 %2449
  %2451 = vrot.lane.b32.xlu0 %v1851, 12
  %v2452 = vpop.permute.xlu0 %2451
  %2453 = vrot.lane.b32.xlu0 %v1850, 12
  %v2454 = vpop.permute.xlu0 %2453
  %2455 = vrot.lane.b32.xlu0 %v1849, 12
  %v2456 = vpop.permute.xlu0 %2455
  %2457 = vrot.lane.b32.xlu0 %v1848, 12
  %v2458 = vpop.permute.xlu0 %2457
  %2459 = vrot.lane.b32.xlu0 %v1847, 12
  %v2460 = vpop.permute.xlu0 %2459
  %2461 = vrot.lane.b32.xlu0 %v1846, 12
  %v2462 = vpop.permute.xlu0 %2461
  %2463 = vrot.lane.b32.xlu0 %v1845, 12
  %v2464 = vpop.permute.xlu0 %2463
  %2465 = vrot.lane.b32.xlu0 %v1844, 12
  %v2466 = vpop.permute.xlu0 %2465
  %2467 = vrot.lane.b32.xlu0 %v1843, 12
  %v2468 = vpop.permute.xlu0 %2467
  %2469 = vrot.lane.b32.xlu0 %v1842, 12
  %v2470 = vpop.permute.xlu0 %2469
  %2471 = vrot.lane.b32.xlu0 %v1841, 12
  %v2472 = vpop.permute.xlu0 %2471
  %2473 = vrot.lane.b32.xlu0 %v1840, 12
  %v2474 = vpop.permute.xlu0 %2473
  %2475 = vrot.lane.b32.xlu0 %v1839, 12
  %v2476 = vpop.permute.xlu0 %2475
  %2477 = vrot.lane.b32.xlu0 %v1838, 12
  %v2478 = vpop.permute.xlu0 %2477
  %2479 = vrot.lane.b32.xlu0 %v1837, 12
  %v2480 = vpop.permute.xlu0 %2479
  %2481 = vrot.lane.b32.xlu0 %v1836, 12
  %v2482 = vpop.permute.xlu0 %2481
  %2483 = vrot.lane.b32.xlu0 %v1835, 12
  %v2484 = vpop.permute.xlu0 %2483
  %2485 = vrot.lane.b32.xlu0 %v1834, 12
  %v2486 = vpop.permute.xlu0 %2485
  %2487 = vrot.lane.b32.xlu0 %v1833, 12
  %v2488 = vpop.permute.xlu0 %2487
  %2489 = vrot.lane.b32.xlu0 %v1832, 12
  %v2490 = vpop.permute.xlu0 %2489
  %2491 = vrot.lane.b32.xlu0 %v1831, 12
  %v2492 = vpop.permute.xlu0 %2491
  %2493 = vrot.lane.b32.xlu0 %v1830, 12
  %v2494 = vpop.permute.xlu0 %2493
  %2495 = vrot.lane.b32.xlu0 %v1829, 12
  %v2496 = vpop.permute.xlu0 %2495
  %2497 = vrot.lane.b32.xlu0 %v1828, 12
  %v2498 = vpop.permute.xlu0 %2497
  %2499 = vrot.lane.b32.xlu0 %v1827, 12
  %v2500 = vpop.permute.xlu0 %2499
  %2501 = vrot.lane.b32.xlu0 %v1826, 12
  %v2502 = vpop.permute.xlu0 %2501
  %2503 = vrot.lane.b32.xlu0 %v1825, 12
  %v2504 = vpop.permute.xlu0 %2503
  %2505 = vrot.lane.b32.xlu0 %v1824, 12
  %v2506 = vpop.permute.xlu0 %2505
  %2507 = vrot.lane.b32.xlu0 %v1823, 12
  %v2508 = vpop.permute.xlu0 %2507
  %2509 = vrot.lane.b32.xlu0 %v1822, 12
  %v2510 = vpop.permute.xlu0 %2509
  %2511 = vrot.lane.b32.xlu0 %v1821, 12
  %v2512 = vpop.permute.xlu0 %2511
  %2513 = vrot.lane.b32.xlu0 %v1820, 12
  %v2514 = vpop.permute.xlu0 %2513
  %2515 = vrot.lane.b32.xlu0 %v1819, 12
  %v2516 = vpop.permute.xlu0 %2515
  %2517 = vrot.lane.b32.xlu0 %v1882, 12
  %v2518 = vpop.permute.xlu0 %2517
  %2519 = vrot.lane.b32.xlu0 %v1881, 12
  %v2520 = vpop.permute.xlu0 %2519
  %2521 = vrot.lane.b32.xlu0 %v1880, 12
  %v2522 = vpop.permute.xlu0 %2521
  %v2587 = vsel %vm916, %v1691, %v1948
  %v2588 = vsel %vm916, %v1692, %v1950
  %v2589 = vsel %vm916, %v1693, %v1952
  %v2590 = vsel %vm916, %v1694, %v1954
  %v2591 = vsel %vm916, %v1695, %v1956
  %v2592 = vsel %vm916, %v1696, %v1958
  %v2593 = vsel %vm916, %v1697, %v1960
  %v2594 = vsel %vm916, %v1698, %v1962
  %v2595 = vsel %vm916, %v1699, %v1964
  %v2596 = vsel %vm916, %v1700, %v1966
  %v2597 = vsel %vm916, %v1701, %v1968
  %v2598 = vsel %vm916, %v1702, %v1970
  %v2599 = vsel %vm916, %v1703, %v1972
  %v2600 = vsel %vm916, %v1704, %v1974
  %v2601 = vsel %vm916, %v1705, %v1976
  %v2602 = vsel %vm916, %v1706, %v1978
  %v2603 = vsel %vm916, %v1707, %v1980
  %v2604 = vsel %vm916, %v1708, %v1982
  %v2605 = vsel %vm916, %v1709, %v1984
  %v2606 = vsel %vm916, %v1710, %v1986
  %v2607 = vsel %vm916, %v1711, %v1988
  %v2608 = vsel %vm916, %v1712, %v1990
  %v2609 = vsel %vm916, %v1713, %v1992
  %v2610 = vsel %vm916, %v1714, %v1994
  %v2611 = vsel %vm916, %v1715, %v1996
  %v2612 = vsel %vm916, %v1716, %v1998
  %v2613 = vsel %vm916, %v1717, %v2000
  %v2614 = vsel %vm916, %v1718, %v2002
  %v2615 = vsel %vm916, %v1719, %v2004
  %v2616 = vsel %vm916, %v1720, %v2006
  %v2617 = vsel %vm916, %v1721, %v2008
  %v2618 = vsel %vm916, %v1722, %v2010
  %v2619 = vsel %vm916, %v1723, %v2012
  %v2620 = vsel %vm916, %v1724, %v2014
  %v2621 = vsel %vm916, %v1725, %v2016
  %v2622 = vsel %vm916, %v1726, %v2018
  %v2623 = vsel %vm916, %v1727, %v2020
  %v2624 = vsel %vm916, %v1728, %v2022
  %v2625 = vsel %vm916, %v1729, %v2024
  %v2626 = vsel %vm916, %v1730, %v2026
  %v2627 = vsel %vm916, %v1731, %v2028
  %v2628 = vsel %vm916, %v1732, %v2030
  %v2629 = vsel %vm916, %v1733, %v2032
  %v2630 = vsel %vm916, %v1734, %v2034
  %v2631 = vsel %vm916, %v1735, %v2036
  %v2632 = vsel %vm916, %v1736, %v2038
  %v2633 = vsel %vm916, %v1737, %v2040
  %v2634 = vsel %vm916, %v1738, %v2042
  %v2635 = vsel %vm916, %v1739, %v2044
  %v2636 = vsel %vm916, %v1740, %v2046
  %v2637 = vsel %vm916, %v1741, %v2048
  %v2638 = vsel %vm916, %v1742, %v2050
  %v2639 = vsel %vm916, %v1743, %v2052
  %v2640 = vsel %vm916, %v1744, %v2054
  %v2641 = vsel %vm916, %v1745, %v2056
  %v2642 = vsel %vm916, %v1746, %v2058
  %v2643 = vsel %vm916, %v1747, %v2060
  %v2644 = vsel %vm916, %v1748, %v2062
  %v2645 = vsel %vm916, %v1749, %v2064
  %v2646 = vsel %vm916, %v1750, %v2066
  %v2647 = vsel %vm916, %v1751, %v2068
  %v2648 = vsel %vm916, %v1752, %v2070
  %v2649 = vsel %vm916, %v1753, %v2072
  %v2650 = vsel %vm916, %v1754, %v2074
  %v2651 = vsel %vm981, %v2587, %v2204
  %v2652 = vsel %vm981, %v2588, %v2206
  %v2653 = vsel %vm981, %v2589, %v2208
  %v2654 = vsel %vm981, %v2590, %v2210
  %v2655 = vsel %vm981, %v2591, %v2212
  %v2656 = vsel %vm981, %v2592, %v2214
  %v2657 = vsel %vm981, %v2593, %v2216
  %v2658 = vsel %vm981, %v2594, %v2218
  %v2659 = vsel %vm981, %v2595, %v2220
  %v2660 = vsel %vm981, %v2596, %v2222
  %v2661 = vsel %vm981, %v2597, %v2224
  %v2662 = vsel %vm981, %v2598, %v2226
  %v2663 = vsel %vm981, %v2599, %v2228
  %v2664 = vsel %vm981, %v2600, %v2230
  %v2665 = vsel %vm981, %v2601, %v2232
  %v2666 = vsel %vm981, %v2602, %v2234
  %v2667 = vsel %vm981, %v2603, %v2236
  %v2668 = vsel %vm981, %v2604, %v2238
  %v2669 = vsel %vm981, %v2605, %v2240
  %v2670 = vsel %vm981, %v2606, %v2242
  %v2671 = vsel %vm981, %v2607, %v2244
  %v2672 = vsel %vm981, %v2608, %v2246
  %v2673 = vsel %vm981, %v2609, %v2248
  %v2674 = vsel %vm981, %v2610, %v2250
  %v2675 = vsel %vm981, %v2611, %v2252
  %v2676 = vsel %vm981, %v2612, %v2254
  %v2677 = vsel %vm981, %v2613, %v2256
  %v2678 = vsel %vm981, %v2614, %v2258
  %v2679 = vsel %vm981, %v2615, %v2260
  %v2680 = vsel %vm981, %v2616, %v2262
  %v2681 = vsel %vm981, %v2617, %v2264
  %v2682 = vsel %vm981, %v2618, %v2266
  %v2683 = vsel %vm981, %v2619, %v2268
  %v2684 = vsel %vm981, %v2620, %v2270
  %v2685 = vsel %vm981, %v2621, %v2272
  %v2686 = vsel %vm981, %v2622, %v2274
  %v2687 = vsel %vm981, %v2623, %v2276
  %v2688 = vsel %vm981, %v2624, %v2278
  %v2689 = vsel %vm981, %v2625, %v2280
  %v2690 = vsel %vm981, %v2626, %v2282
  %v2691 = vsel %vm981, %v2627, %v2284
  %v2692 = vsel %vm981, %v2628, %v2286
  %v2693 = vsel %vm981, %v2629, %v2288
  %v2694 = vsel %vm981, %v2630, %v2290
  %v2695 = vsel %vm981, %v2631, %v2292
  %v2696 = vsel %vm981, %v2632, %v2294
  %v2697 = vsel %vm981, %v2633, %v2296
  %v2698 = vsel %vm981, %v2634, %v2298
  %v2699 = vsel %vm981, %v2635, %v2300
  %v2700 = vsel %vm981, %v2636, %v2302
  %v2701 = vsel %vm981, %v2637, %v2304
  %v2702 = vsel %vm981, %v2638, %v2306
  %v2703 = vsel %vm981, %v2639, %v2308
  %v2704 = vsel %vm981, %v2640, %v2310
  %v2705 = vsel %vm981, %v2641, %v2312
  %v2706 = vsel %vm981, %v2642, %v2314
  %v2707 = vsel %vm981, %v2643, %v2316
  %v2708 = vsel %vm981, %v2644, %v2318
  %v2709 = vsel %vm981, %v2645, %v2320
  %v2710 = vsel %vm981, %v2646, %v2322
  %v2711 = vsel %vm981, %v2647, %v2324
  %v2712 = vsel %vm981, %v2648, %v2326
  %v2713 = vsel %vm981, %v2649, %v2328
  %v2714 = vsel %vm981, %v2650, %v2330
  %v2715 = vsel %vm1046, %v2651, %v2396
  %v2716 = vsel %vm1046, %v2652, %v2398
  %v2717 = vsel %vm1046, %v2653, %v2400
  %v2718 = vsel %vm1046, %v2654, %v2402
  %v2719 = vsel %vm1046, %v2655, %v2404
  %v2720 = vsel %vm1046, %v2656, %v2406
  %v2721 = vsel %vm1046, %v2657, %v2408
  %v2722 = vsel %vm1046, %v2658, %v2410
  %v2723 = vsel %vm1046, %v2659, %v2412
  %v2724 = vsel %vm1046, %v2660, %v2414
  %v2725 = vsel %vm1046, %v2661, %v2416
  %v2726 = vsel %vm1046, %v2662, %v2418
  %v2727 = vsel %vm1046, %v2663, %v2420
  %v2728 = vsel %vm1046, %v2664, %v2422
  %v2729 = vsel %vm1046, %v2665, %v2424
  %v2730 = vsel %vm1046, %v2666, %v2426
  %v2731 = vsel %vm1046, %v2667, %v2428
  %v2732 = vsel %vm1046, %v2668, %v2430
  %v2733 = vsel %vm1046, %v2669, %v2432
  %v2734 = vsel %vm1046, %v2670, %v2434
  %v2735 = vsel %vm1046, %v2671, %v2436
  %v2736 = vsel %vm1046, %v2672, %v2438
  %v2737 = vsel %vm1046, %v2673, %v2440
  %v2738 = vsel %vm1046, %v2674, %v2442
  %v2739 = vsel %vm1046, %v2675, %v2444
  %v2740 = vsel %vm1046, %v2676, %v2446
  %v2741 = vsel %vm1046, %v2677, %v2448
  %v2742 = vsel %vm1046, %v2678, %v2450
  %v2743 = vsel %vm1046, %v2679, %v2452
  %v2744 = vsel %vm1046, %v2680, %v2454
  %v2745 = vsel %vm1046, %v2681, %v2456
  %v2746 = vsel %vm1046, %v2682, %v2458
  %v2747 = vsel %vm1046, %v2683, %v2460
  %v2748 = vsel %vm1046, %v2684, %v2462
  %v2749 = vsel %vm1046, %v2685, %v2464
  %v2750 = vsel %vm1046, %v2686, %v2466
  %v2751 = vsel %vm1046, %v2687, %v2468
  %v2752 = vsel %vm1046, %v2688, %v2470
  %v2753 = vsel %vm1046, %v2689, %v2472
  %v2754 = vsel %vm1046, %v2690, %v2474
  %v2755 = vsel %vm1046, %v2691, %v2476
  %v2756 = vsel %vm1046, %v2692, %v2478
  %v2757 = vsel %vm1046, %v2693, %v2480
  %v2758 = vsel %vm1046, %v2694, %v2482
  %v2759 = vsel %vm1046, %v2695, %v2484
  %v2760 = vsel %vm1046, %v2696, %v2486
  %v2761 = vsel %vm1046, %v2697, %v2488
  %v2762 = vsel %vm1046, %v2698, %v2490
  %v2763 = vsel %vm1046, %v2699, %v2492
  %v2764 = vsel %vm1046, %v2700, %v2494
  %v2765 = vsel %vm1046, %v2701, %v2496
  %v2766 = vsel %vm1046, %v2702, %v2498
  %v2767 = vsel %vm1046, %v2703, %v2500
  %v2768 = vsel %vm1046, %v2704, %v2502
  %v2769 = vsel %vm1046, %v2705, %v2504
  %v2770 = vsel %vm1046, %v2706, %v2506
  %v2771 = vsel %vm1046, %v2707, %v2508
  %v2772 = vsel %vm1046, %v2708, %v2510
  %v2773 = vsel %vm1046, %v2709, %v2512
  %v2774 = vsel %vm1046, %v2710, %v2514
  %v2775 = vsel %vm1046, %v2711, %v2516
  %v2776 = vsel %vm1046, %v2712, %v2518
  %v2777 = vsel %vm1046, %v2713, %v2520
  %v2778 = vsel %vm1046, %v2714, %v2522
  %v2779 = vld [vmem:[%s2] sm:$0xff]
  %v2780 = vld [vmem:[%s2 + $0x8] sm:$0xff]
  %v2781 = vld [vmem:[%s3] sm:$0x1]
  %v2783 = vlaneseq
  %v2784 = vshrl.u32 %v2783, 7
  %v2785 = vsub.s32 0, %v2784
  %v2786 = vrot.slane %v2781, %v2785
  %v2789 = vsel %vm1113, %v2715, 0
  %v2792 = vsel %vm1113, %v2716, 0
  %v2795 = vsel %vm1113, %v2717, 0
  %v2798 = vsel %vm1113, %v2718, 0
  %v2801 = vsel %vm1113, %v2719, 0
  %v2804 = vsel %vm1113, %v2720, 0
  %v2807 = vsel %vm1113, %v2721, 0
  %v2810 = vsel %vm1113, %v2722, 0
  %v2813 = vsel %vm1113, %v2723, 0
  %v2816 = vsel %vm1113, %v2724, 0
  %v2819 = vsel %vm1113, %v2725, 0
  %v2822 = vsel %vm1113, %v2726, 0
  %v2825 = vsel %vm1113, %v2727, 0
  %v2828 = vsel %vm1113, %v2728, 0
  %v2831 = vsel %vm1113, %v2729, 0
  %v2834 = vsel %vm1113, %v2730, 0
  %v2837 = vsel %vm1113, %v2731, 0
  %v2840 = vsel %vm1113, %v2732, 0
  %v2843 = vsel %vm1113, %v2733, 0
  %v2846 = vsel %vm1113, %v2734, 0
  %v2849 = vsel %vm1113, %v2735, 0
  %v2852 = vsel %vm1113, %v2736, 0
  %v2855 = vsel %vm1113, %v2737, 0
  %v2858 = vsel %vm1113, %v2738, 0
  %v2861 = vsel %vm1113, %v2739, 0
  %v2864 = vsel %vm1113, %v2740, 0
  %v2867 = vsel %vm1113, %v2741, 0
  %v2870 = vsel %vm1113, %v2742, 0
  %v2873 = vsel %vm1113, %v2743, 0
  %v2876 = vsel %vm1113, %v2744, 0
  %v2879 = vsel %vm1113, %v2745, 0
  %v2882 = vsel %vm1113, %v2746, 0
  %v2885 = vsel %vm1113, %v2747, 0
  %v2888 = vsel %vm1113, %v2748, 0
  %v2891 = vsel %vm1113, %v2749, 0
  %v2894 = vsel %vm1113, %v2750, 0
  %v2897 = vsel %vm1113, %v2751, 0
  %v2900 = vsel %vm1113, %v2752, 0
  %v2903 = vsel %vm1113, %v2753, 0
  %v2906 = vsel %vm1113, %v2754, 0
  %v2909 = vsel %vm1113, %v2755, 0
  %v2912 = vsel %vm1113, %v2756, 0
  %v2915 = vsel %vm1113, %v2757, 0
  %v2918 = vsel %vm1113, %v2758, 0
  %v2921 = vsel %vm1113, %v2759, 0
  %v2924 = vsel %vm1113, %v2760, 0
  %v2927 = vsel %vm1113, %v2761, 0
  %v2930 = vsel %vm1113, %v2762, 0
  %v2933 = vsel %vm1113, %v2763, 0
  %v2936 = vsel %vm1113, %v2764, 0
  %v2939 = vsel %vm1113, %v2765, 0
  %v2942 = vsel %vm1113, %v2766, 0
  %v2945 = vsel %vm1113, %v2767, 0
  %v2948 = vsel %vm1113, %v2768, 0
  %v2951 = vsel %vm1113, %v2769, 0
  %v2954 = vsel %vm1113, %v2770, 0
  %v2957 = vsel %vm1113, %v2771, 0
  %v2960 = vsel %vm1113, %v2772, 0
  %v2963 = vsel %vm1113, %v2773, 0
  %v2966 = vsel %vm1113, %v2774, 0
  %v2969 = vsel %vm1113, %v2775, 0
  %v2972 = vsel %vm1113, %v2776, 0
  %v2975 = vsel %vm1113, %v2777, 0
  %v2978 = vsel %vm1113, %v2778, 0
  %2980 = vmatprep.subr.mxu0 0.0
  %2981 = vmatpush1.msra.mxu0 %v2779
  %2982 = vmatprep.subr.mxu0 0.0
  %2983 = vmatpush1.msra.mxu0 %v2780
  %2984 = vmatprep.subr.mxu0 0.0
  %2985 = vmatpush1.msra.mxu0 0.0
  %2986 = vmatprep.subr.mxu0 0.0
  %2987 = vmatpush1.msra.mxu0 0.0
  %2988 = vmatprep.subr.mxu0 0.0
  %2989 = vmatpush1.msra.mxu0 0.0
  %2990 = vmatprep.subr.mxu0 0.0
  %2991 = vmatpush1.msra.mxu0 0.0
  %2992 = vmatprep.subr.mxu0 0.0
  %2993 = vmatpush1.msra.mxu0 0.0
  %2994 = vmatprep.subr.mxu0 0.0
  %2995 = vmatpush1.msra.mxu0 0.0
  %2996 = vmatprep.subr.mxu0 0.0
  %2997 = vmatpush1.msra.mxu0 0.0
  %2998 = vmatprep.subr.mxu0 0.0
  %2999 = vmatpush1.msra.mxu0 0.0
  %3000 = vmatprep.subr.mxu0 0.0
  %3001 = vmatpush1.msra.mxu0 0.0
  %3002 = vmatprep.subr.mxu0 0.0
  %3003 = vmatpush1.msra.mxu0 0.0
  %3004 = vmatprep.subr.mxu0 0.0
  %3005 = vmatpush1.msra.mxu0 0.0
  %3006 = vmatprep.subr.mxu0 0.0
  %3007 = vmatpush1.msra.mxu0 0.0
  %3008 = vmatprep.subr.mxu0 0.0
  %3009 = vmatpush1.msra.mxu0 0.0
  %3010 = vmatprep.subr.mxu0 0.0
  %3011 = vmatpush1.msra.mxu0 0.0
  %3012 = vmatprep.subr.mxu0 0.0
  %3013 = vmatpush1.msra.mxu0 0.0
  %3014 = vmatprep.subr.mxu0 0.0
  %3015 = vmatpush1.msra.mxu0 0.0
  %3016 = vmatprep.subr.mxu0 0.0
  %3017 = vmatpush1.msra.mxu0 0.0
  %3018 = vmatprep.subr.mxu0 0.0
  %3019 = vmatpush1.msra.mxu0 0.0
  %3020 = vmatprep.subr.mxu0 0.0
  %3021 = vmatpush1.msra.mxu0 0.0
  %3022 = vmatprep.subr.mxu0 0.0
  %3023 = vmatpush1.msra.mxu0 0.0
  %3024 = vmatprep.subr.mxu0 0.0
  %3025 = vmatpush1.msra.mxu0 0.0
  %3026 = vmatprep.subr.mxu0 0.0
  %3027 = vmatpush1.msra.mxu0 0.0
  %3028 = vmatprep.subr.mxu0 0.0
  %3029 = vmatpush1.msra.mxu0 0.0
  %3030 = vmatprep.subr.mxu0 0.0
  %3031 = vmatpush1.msra.mxu0 0.0
  %3032 = vmatprep.subr.mxu0 0.0
  %3033 = vmatpush1.msra.mxu0 0.0
  %3034 = vmatprep.subr.mxu0 0.0
  %3035 = vmatpush1.msra.mxu0 0.0
  %3036 = vmatprep.subr.mxu0 0.0
  %3037 = vmatpush1.msra.mxu0 0.0
  %3038 = vmatprep.subr.mxu0 0.0
  %3039 = vmatpush1.msra.mxu0 0.0
  %3040 = vmatprep.subr.mxu0 0.0
  %3041 = vmatpush1.msra.mxu0 0.0
  %3042 = vmatprep.subr.mxu0 0.0
  %3043 = vmatpush1.msra.mxu0 0.0
  %3044 = vmatprep.mubr.f32.mxu0 0.0
  %3045 = vmatmul.mubr.f32.gmra.mrb[0].mxu0 %v2789
  %v3046 = vpop.f32.mrb[0].mxu0
  %v3047 = vadd.f32 %v2786, %v3046
  %v3048 = vpop.f32.mrb[0].mxu0
  %3049 = vmatprep.mubr.f32.mxu0 0.0
  %3050 = vmatmul.mubr.f32.gmra.mrb[0].mxu0 %v2792
  %v3051 = vpop.f32.mrb[0].mxu0
  %v3052 = vadd.f32 %v2786, %v3051
  %v3053 = vpop.f32.mrb[0].mxu0
  %3054 = vmatprep.mubr.f32.mxu0 0.0
  %3055 = vmatmul.mubr.f32.gmra.mrb[0].mxu0 %v2795
  %v3056 = vpop.f32.mrb[0].mxu0
  %v3057 = vadd.f32 %v2786, %v3056
  %v3058 = vpop.f32.mrb[0].mxu0
  %3059 = vmatprep.mubr.f32.mxu0 0.0
  %3060 = vmatmul.mubr.f32.gmra.mrb[0].mxu0 %v2798
  %v3061 = vpop.f32.mrb[0].mxu0
  %v3062 = vadd.f32 %v2786, %v3061
  %v3063 = vpop.f32.mrb[0].mxu0
  %3064 = vmatprep.mubr.f32.mxu0 0.0
  %3065 = vmatmul.mubr.f32.gmra.mrb[0].mxu0 %v2801
  %v3066 = vpop.f32.mrb[0].mxu0
  %v3067 = vadd.f32 %v2786, %v3066
  %v3068 = vpop.f32.mrb[0].mxu0
  %3069 = vmatprep.mubr.f32.mxu0 0.0
  %3070 = vmatmul.mubr.f32.gmra.mrb[0].mxu0 %v2804
  %v3071 = vpop.f32.mrb[0].mxu0
  %v3072 = vadd.f32 %v2786, %v3071
  %v3073 = vpop.f32.mrb[0].mxu0
  %3074 = vmatprep.mubr.f32.mxu0 0.0
  %3075 = vmatmul.mubr.f32.gmra.mrb[0].mxu0 %v2807
  %v3076 = vpop.f32.mrb[0].mxu0
  %v3077 = vadd.f32 %v2786, %v3076
  %v3078 = vpop.f32.mrb[0].mxu0
  %3079 = vmatprep.mubr.f32.mxu0 0.0
  %3080 = vmatmul.mubr.f32.gmra.mrb[0].mxu0 %v2810
  %v3081 = vpop.f32.mrb[0].mxu0
  %v3082 = vadd.f32 %v2786, %v3081
  %v3083 = vpop.f32.mrb[0].mxu0
  %3084 = vmatprep.mubr.f32.mxu0 0.0
  %3085 = vmatmul.mubr.f32.gmra.mrb[0].mxu0 %v2813
  %v3086 = vpop.f32.mrb[0].mxu0
  %v3087 = vadd.f32 %v2786, %v3086
  %v3088 = vpop.f32.mrb[0].mxu0
  %3089 = vmatprep.mubr.f32.mxu0 0.0
  %3090 = vmatmul.mubr.f32.gmra.mrb[0].mxu0 %v2816
  %v3091 = vpop.f32.mrb[0].mxu0
  %v3092 = vadd.f32 %v2786, %v3091
  %v3093 = vpop.f32.mrb[0].mxu0
  %3094 = vmatprep.mubr.f32.mxu0 0.0
  %3095 = vmatmul.mubr.f32.gmra.mrb[0].mxu0 %v2819
  %v3096 = vpop.f32.mrb[0].mxu0
  %v3097 = vadd.f32 %v2786, %v3096
  %v3098 = vpop.f32.mrb[0].mxu0
  %3099 = vmatprep.mubr.f32.mxu0 0.0
  %3100 = vmatmul.mubr.f32.gmra.mrb[0].mxu0 %v2822
  %v3101 = vpop.f32.mrb[0].mxu0
  %v3102 = vadd.f32 %v2786, %v3101
  %v3103 = vpop.f32.mrb[0].mxu0
  %3104 = vmatprep.mubr.f32.mxu0 0.0
  %3105 = vmatmul.mubr.f32.gmra.mrb[0].mxu0 %v2825
  %v3106 = vpop.f32.mrb[0].mxu0
  %v3107 = vadd.f32 %v2786, %v3106
  %v3108 = vpop.f32.mrb[0].mxu0
  %3109 = vmatprep.mubr.f32.mxu0 0.0
  %3110 = vmatmul.mubr.f32.gmra.mrb[0].mxu0 %v2828
  %v3111 = vpop.f32.mrb[0].mxu0
  %v3112 = vadd.f32 %v2786, %v3111
  %v3113 = vpop.f32.mrb[0].mxu0
  %3114 = vmatprep.mubr.f32.mxu0 0.0
  %3115 = vmatmul.mubr.f32.gmra.mrb[0].mxu0 %v2831
  %v3116 = vpop.f32.mrb[0].mxu0
  %v3117 = vadd.f32 %v2786, %v3116
  %v3118 = vpop.f32.mrb[0].mxu0
  %3119 = vmatprep.mubr.f32.mxu0 0.0
  %3120 = vmatmul.mubr.f32.gmra.mrb[0].mxu0 %v2834
  %v3121 = vpop.f32.mrb[0].mxu0
  %v3122 = vadd.f32 %v2786, %v3121
  %v3123 = vpop.f32.mrb[0].mxu0
  %3124 = vmatprep.mubr.f32.mxu0 0.0
  %3125 = vmatmul.mubr.f32.gmra.mrb[0].mxu0 %v2837
  %v3126 = vpop.f32.mrb[0].mxu0
  %v3127 = vadd.f32 %v2786, %v3126
  %v3128 = vpop.f32.mrb[0].mxu0
  %3129 = vmatprep.mubr.f32.mxu0 0.0
  %3130 = vmatmul.mubr.f32.gmra.mrb[0].mxu0 %v2840
  %v3131 = vpop.f32.mrb[0].mxu0
  %v3132 = vadd.f32 %v2786, %v3131
  %v3133 = vpop.f32.mrb[0].mxu0
  %3134 = vmatprep.mubr.f32.mxu0 0.0
  %3135 = vmatmul.mubr.f32.gmra.mrb[0].mxu0 %v2843
  %v3136 = vpop.f32.mrb[0].mxu0
  %v3137 = vadd.f32 %v2786, %v3136
  %v3138 = vpop.f32.mrb[0].mxu0
  %3139 = vmatprep.mubr.f32.mxu0 0.0
  %3140 = vmatmul.mubr.f32.gmra.mrb[0].mxu0 %v2846
  %v3141 = vpop.f32.mrb[0].mxu0
  %v3142 = vadd.f32 %v2786, %v3141
  %v3143 = vpop.f32.mrb[0].mxu0
  %3144 = vmatprep.mubr.f32.mxu0 0.0
  %3145 = vmatmul.mubr.f32.gmra.mrb[0].mxu0 %v2849
  %v3146 = vpop.f32.mrb[0].mxu0
  %v3147 = vadd.f32 %v2786, %v3146
  %v3148 = vpop.f32.mrb[0].mxu0
  %3149 = vmatprep.mubr.f32.mxu0 0.0
  %3150 = vmatmul.mubr.f32.gmra.mrb[0].mxu0 %v2852
  %v3151 = vpop.f32.mrb[0].mxu0
  %v3152 = vadd.f32 %v2786, %v3151
  %v3153 = vpop.f32.mrb[0].mxu0
  %3154 = vmatprep.mubr.f32.mxu0 0.0
  %3155 = vmatmul.mubr.f32.gmra.mrb[0].mxu0 %v2855
  %v3156 = vpop.f32.mrb[0].mxu0
  %v3157 = vadd.f32 %v2786, %v3156
  %v3158 = vpop.f32.mrb[0].mxu0
  %3159 = vmatprep.mubr.f32.mxu0 0.0
  %3160 = vmatmul.mubr.f32.gmra.mrb[0].mxu0 %v2858
  %v3161 = vpop.f32.mrb[0].mxu0
  %v3162 = vadd.f32 %v2786, %v3161
  %v3163 = vpop.f32.mrb[0].mxu0
  %3164 = vmatprep.mubr.f32.mxu0 0.0
  %3165 = vmatmul.mubr.f32.gmra.mrb[0].mxu0 %v2861
  %v3166 = vpop.f32.mrb[0].mxu0
  %v3167 = vadd.f32 %v2786, %v3166
  %v3168 = vpop.f32.mrb[0].mxu0
  %3169 = vmatprep.mubr.f32.mxu0 0.0
  %3170 = vmatmul.mubr.f32.gmra.mrb[0].mxu0 %v2864
  %v3171 = vpop.f32.mrb[0].mxu0
  %v3172 = vadd.f32 %v2786, %v3171
  %v3173 = vpop.f32.mrb[0].mxu0
  %3174 = vmatprep.mubr.f32.mxu0 0.0
  %3175 = vmatmul.mubr.f32.gmra.mrb[0].mxu0 %v2867
  %v3176 = vpop.f32.mrb[0].mxu0
  %v3177 = vadd.f32 %v2786, %v3176
  %v3178 = vpop.f32.mrb[0].mxu0
  %3179 = vmatprep.mubr.f32.mxu0 0.0
  %3180 = vmatmul.mubr.f32.gmra.mrb[0].mxu0 %v2870
  %v3181 = vpop.f32.mrb[0].mxu0
  %v3182 = vadd.f32 %v2786, %v3181
  %v3183 = vpop.f32.mrb[0].mxu0
  %3184 = vmatprep.mubr.f32.mxu0 0.0
  %3185 = vmatmul.mubr.f32.gmra.mrb[0].mxu0 %v2873
  %v3186 = vpop.f32.mrb[0].mxu0
  %v3187 = vadd.f32 %v2786, %v3186
  %v3188 = vpop.f32.mrb[0].mxu0
  %3189 = vmatprep.mubr.f32.mxu0 0.0
  %3190 = vmatmul.mubr.f32.gmra.mrb[0].mxu0 %v2876
  %v3191 = vpop.f32.mrb[0].mxu0
  %v3192 = vadd.f32 %v2786, %v3191
  %v3193 = vpop.f32.mrb[0].mxu0
  %3194 = vmatprep.mubr.f32.mxu0 0.0
  %3195 = vmatmul.mubr.f32.gmra.mrb[0].mxu0 %v2879
  %v3196 = vpop.f32.mrb[0].mxu0
  %v3197 = vadd.f32 %v2786, %v3196
  %v3198 = vpop.f32.mrb[0].mxu0
  %3199 = vmatprep.mubr.f32.mxu0 0.0
  %3200 = vmatmul.mubr.f32.gmra.mrb[0].mxu0 %v2882
  %v3201 = vpop.f32.mrb[0].mxu0
  %v3202 = vadd.f32 %v2786, %v3201
  %v3203 = vpop.f32.mrb[0].mxu0
  %3204 = vmatprep.mubr.f32.mxu0 0.0
  %3205 = vmatmul.mubr.f32.gmra.mrb[0].mxu0 %v2885
  %v3206 = vpop.f32.mrb[0].mxu0
  %v3207 = vadd.f32 %v2786, %v3206
  %v3208 = vpop.f32.mrb[0].mxu0
  %3209 = vmatprep.mubr.f32.mxu0 0.0
  %3210 = vmatmul.mubr.f32.gmra.mrb[0].mxu0 %v2888
  %v3211 = vpop.f32.mrb[0].mxu0
  %v3212 = vadd.f32 %v2786, %v3211
  %v3213 = vpop.f32.mrb[0].mxu0
  %3214 = vmatprep.mubr.f32.mxu0 0.0
  %3215 = vmatmul.mubr.f32.gmra.mrb[0].mxu0 %v2891
  %v3216 = vpop.f32.mrb[0].mxu0
  %v3217 = vadd.f32 %v2786, %v3216
  %v3218 = vpop.f32.mrb[0].mxu0
  %3219 = vmatprep.mubr.f32.mxu0 0.0
  %3220 = vmatmul.mubr.f32.gmra.mrb[0].mxu0 %v2894
  %v3221 = vpop.f32.mrb[0].mxu0
  %v3222 = vadd.f32 %v2786, %v3221
  %v3223 = vpop.f32.mrb[0].mxu0
  %3224 = vmatprep.mubr.f32.mxu0 0.0
  %3225 = vmatmul.mubr.f32.gmra.mrb[0].mxu0 %v2897
  %v3226 = vpop.f32.mrb[0].mxu0
  %v3227 = vadd.f32 %v2786, %v3226
  %v3228 = vpop.f32.mrb[0].mxu0
  %3229 = vmatprep.mubr.f32.mxu0 0.0
  %3230 = vmatmul.mubr.f32.gmra.mrb[0].mxu0 %v2900
  %v3231 = vpop.f32.mrb[0].mxu0
  %v3232 = vadd.f32 %v2786, %v3231
  %v3233 = vpop.f32.mrb[0].mxu0
  %3234 = vmatprep.mubr.f32.mxu0 0.0
  %3235 = vmatmul.mubr.f32.gmra.mrb[0].mxu0 %v2903
  %v3236 = vpop.f32.mrb[0].mxu0
  %v3237 = vadd.f32 %v2786, %v3236
  %v3238 = vpop.f32.mrb[0].mxu0
  %3239 = vmatprep.mubr.f32.mxu0 0.0
  %3240 = vmatmul.mubr.f32.gmra.mrb[0].mxu0 %v2906
  %v3241 = vpop.f32.mrb[0].mxu0
  %v3242 = vadd.f32 %v2786, %v3241
  %v3243 = vpop.f32.mrb[0].mxu0
  %3244 = vmatprep.mubr.f32.mxu0 0.0
  %3245 = vmatmul.mubr.f32.gmra.mrb[0].mxu0 %v2909
  %v3246 = vpop.f32.mrb[0].mxu0
  %v3247 = vadd.f32 %v2786, %v3246
  %v3248 = vpop.f32.mrb[0].mxu0
  %3249 = vmatprep.mubr.f32.mxu0 0.0
  %3250 = vmatmul.mubr.f32.gmra.mrb[0].mxu0 %v2912
  %v3251 = vpop.f32.mrb[0].mxu0
  %v3252 = vadd.f32 %v2786, %v3251
  %v3253 = vpop.f32.mrb[0].mxu0
  %3254 = vmatprep.mubr.f32.mxu0 0.0
  %3255 = vmatmul.mubr.f32.gmra.mrb[0].mxu0 %v2915
  %v3256 = vpop.f32.mrb[0].mxu0
  %v3257 = vadd.f32 %v2786, %v3256
  %v3258 = vpop.f32.mrb[0].mxu0
  %3259 = vmatprep.mubr.f32.mxu0 0.0
  %3260 = vmatmul.mubr.f32.gmra.mrb[0].mxu0 %v2918
  %v3261 = vpop.f32.mrb[0].mxu0
  %v3262 = vadd.f32 %v2786, %v3261
  %v3263 = vpop.f32.mrb[0].mxu0
  %3264 = vmatprep.mubr.f32.mxu0 0.0
  %3265 = vmatmul.mubr.f32.gmra.mrb[0].mxu0 %v2921
  %v3266 = vpop.f32.mrb[0].mxu0
  %v3267 = vadd.f32 %v2786, %v3266
  %v3268 = vpop.f32.mrb[0].mxu0
  %3269 = vmatprep.mubr.f32.mxu0 0.0
  %3270 = vmatmul.mubr.f32.gmra.mrb[0].mxu0 %v2924
  %v3271 = vpop.f32.mrb[0].mxu0
  %v3272 = vadd.f32 %v2786, %v3271
  %v3273 = vpop.f32.mrb[0].mxu0
  %3274 = vmatprep.mubr.f32.mxu0 0.0
  %3275 = vmatmul.mubr.f32.gmra.mrb[0].mxu0 %v2927
  %v3276 = vpop.f32.mrb[0].mxu0
  %v3277 = vadd.f32 %v2786, %v3276
  %v3278 = vpop.f32.mrb[0].mxu0
  %3279 = vmatprep.mubr.f32.mxu0 0.0
  %3280 = vmatmul.mubr.f32.gmra.mrb[0].mxu0 %v2930
  %v3281 = vpop.f32.mrb[0].mxu0
  %v3282 = vadd.f32 %v2786, %v3281
  %v3283 = vpop.f32.mrb[0].mxu0
  %3284 = vmatprep.mubr.f32.mxu0 0.0
  %3285 = vmatmul.mubr.f32.gmra.mrb[0].mxu0 %v2933
  %v3286 = vpop.f32.mrb[0].mxu0
  %v3287 = vadd.f32 %v2786, %v3286
  %v3288 = vpop.f32.mrb[0].mxu0
  %3289 = vmatprep.mubr.f32.mxu0 0.0
  %3290 = vmatmul.mubr.f32.gmra.mrb[0].mxu0 %v2936
  %v3291 = vpop.f32.mrb[0].mxu0
  %v3292 = vadd.f32 %v2786, %v3291
  %v3293 = vpop.f32.mrb[0].mxu0
  %3294 = vmatprep.mubr.f32.mxu0 0.0
  %3295 = vmatmul.mubr.f32.gmra.mrb[0].mxu0 %v2939
  %v3296 = vpop.f32.mrb[0].mxu0
  %v3297 = vadd.f32 %v2786, %v3296
  %v3298 = vpop.f32.mrb[0].mxu0
  %3299 = vmatprep.mubr.f32.mxu0 0.0
  %3300 = vmatmul.mubr.f32.gmra.mrb[0].mxu0 %v2942
  %v3301 = vpop.f32.mrb[0].mxu0
  %v3302 = vadd.f32 %v2786, %v3301
  %v3303 = vpop.f32.mrb[0].mxu0
  %3304 = vmatprep.mubr.f32.mxu0 0.0
  %3305 = vmatmul.mubr.f32.gmra.mrb[0].mxu0 %v2945
  %v3306 = vpop.f32.mrb[0].mxu0
  %v3307 = vadd.f32 %v2786, %v3306
  %v3308 = vpop.f32.mrb[0].mxu0
  %3309 = vmatprep.mubr.f32.mxu0 0.0
  %3310 = vmatmul.mubr.f32.gmra.mrb[0].mxu0 %v2948
  %v3311 = vpop.f32.mrb[0].mxu0
  %v3312 = vadd.f32 %v2786, %v3311
  %v3313 = vpop.f32.mrb[0].mxu0
  %3314 = vmatprep.mubr.f32.mxu0 0.0
  %3315 = vmatmul.mubr.f32.gmra.mrb[0].mxu0 %v2951
  %v3316 = vpop.f32.mrb[0].mxu0
  %v3317 = vadd.f32 %v2786, %v3316
  %v3318 = vpop.f32.mrb[0].mxu0
  %3319 = vmatprep.mubr.f32.mxu0 0.0
  %3320 = vmatmul.mubr.f32.gmra.mrb[0].mxu0 %v2954
  %v3321 = vpop.f32.mrb[0].mxu0
  %v3322 = vadd.f32 %v2786, %v3321
  %v3323 = vpop.f32.mrb[0].mxu0
  %3324 = vmatprep.mubr.f32.mxu0 0.0
  %3325 = vmatmul.mubr.f32.gmra.mrb[0].mxu0 %v2957
  %v3326 = vpop.f32.mrb[0].mxu0
  %v3327 = vadd.f32 %v2786, %v3326
  %v3328 = vpop.f32.mrb[0].mxu0
  %3329 = vmatprep.mubr.f32.mxu0 0.0
  %3330 = vmatmul.mubr.f32.gmra.mrb[0].mxu0 %v2960
  %v3331 = vpop.f32.mrb[0].mxu0
  %v3332 = vadd.f32 %v2786, %v3331
  %v3333 = vpop.f32.mrb[0].mxu0
  %3334 = vmatprep.mubr.f32.mxu0 0.0
  %3335 = vmatmul.mubr.f32.gmra.mrb[0].mxu0 %v2963
  %v3336 = vpop.f32.mrb[0].mxu0
  %v3337 = vadd.f32 %v2786, %v3336
  %v3338 = vpop.f32.mrb[0].mxu0
  %3339 = vmatprep.mubr.f32.mxu0 0.0
  %3340 = vmatmul.mubr.f32.gmra.mrb[0].mxu0 %v2966
  %v3341 = vpop.f32.mrb[0].mxu0
  %v3342 = vadd.f32 %v2786, %v3341
  %v3343 = vpop.f32.mrb[0].mxu0
  %3344 = vmatprep.mubr.f32.mxu0 0.0
  %3345 = vmatmul.mubr.f32.gmra.mrb[0].mxu0 %v2969
  %v3346 = vpop.f32.mrb[0].mxu0
  %v3347 = vadd.f32 %v2786, %v3346
  %v3348 = vpop.f32.mrb[0].mxu0
  %3349 = vmatprep.mubr.f32.mxu0 0.0
  %3350 = vmatmul.mubr.f32.gmra.mrb[0].mxu0 %v2972
  %v3351 = vpop.f32.mrb[0].mxu0
  %v3352 = vadd.f32 %v2786, %v3351
  %v3353 = vpop.f32.mrb[0].mxu0
  %3354 = vmatprep.mubr.f32.mxu0 0.0
  %3355 = vmatmul.mubr.f32.gmra.mrb[0].mxu0 %v2975
  %v3356 = vpop.f32.mrb[0].mxu0
  %v3357 = vadd.f32 %v2786, %v3356
  %v3358 = vpop.f32.mrb[0].mxu0
  %3359 = vmatprep.mubr.f32.mxu0 0.0
  %3360 = vmatmul.mubr.f32.gmra.mrb[0].mxu0 %v2978
  %v3361 = vpop.f32.mrb[0].mxu0
  %v3362 = vadd.f32 %v2786, %v3361
  %v3363 = vpop.f32.mrb[0].mxu0
  %3364 = vdwg.mxu0
  %3365 = vst [vmem:[%s4] sm:$0xff] %v3047
  %3366 = vst [vmem:[%s4 + $0x8] sm:$0xff] %v3052
  %3367 = vst [vmem:[%s4 + $0x10] sm:$0xff] %v3057
  %3368 = vst [vmem:[%s4 + $0x18] sm:$0xff] %v3062
  %3369 = vst [vmem:[%s4 + $0x20] sm:$0xff] %v3067
  %3370 = vst [vmem:[%s4 + $0x28] sm:$0xff] %v3072
  %3371 = vst [vmem:[%s4 + $0x30] sm:$0xff] %v3077
  %3372 = vst [vmem:[%s4 + $0x38] sm:$0xff] %v3082
  %3373 = vst [vmem:[%s4 + $0x40] sm:$0xff] %v3087
  %3374 = vst [vmem:[%s4 + $0x48] sm:$0xff] %v3092
  %3375 = vst [vmem:[%s4 + $0x50] sm:$0xff] %v3097
  %3376 = vst [vmem:[%s4 + $0x58] sm:$0xff] %v3102
  %3377 = vst [vmem:[%s4 + $0x60] sm:$0xff] %v3107
  %3378 = vst [vmem:[%s4 + $0x68] sm:$0xff] %v3112
  %3379 = vst [vmem:[%s4 + $0x70] sm:$0xff] %v3117
  %3380 = vst [vmem:[%s4 + $0x78] sm:$0xff] %v3122
  %3381 = vst [vmem:[%s4 + $0x80] sm:$0xff] %v3127
  %3382 = vst [vmem:[%s4 + $0x88] sm:$0xff] %v3132
  %3383 = vst [vmem:[%s4 + $0x90] sm:$0xff] %v3137
  %3384 = vst [vmem:[%s4 + $0x98] sm:$0xff] %v3142
  %3385 = vst [vmem:[%s4 + $0xa0] sm:$0xff] %v3147
  %3386 = vst [vmem:[%s4 + $0xa8] sm:$0xff] %v3152
  %3387 = vst [vmem:[%s4 + $0xb0] sm:$0xff] %v3157
  %3388 = vst [vmem:[%s4 + $0xb8] sm:$0xff] %v3162
  %3389 = vst [vmem:[%s4 + $0xc0] sm:$0xff] %v3167
  %3390 = vst [vmem:[%s4 + $0xc8] sm:$0xff] %v3172
  %3391 = vst [vmem:[%s4 + $0xd0] sm:$0xff] %v3177
  %3392 = vst [vmem:[%s4 + $0xd8] sm:$0xff] %v3182
  %3393 = vst [vmem:[%s4 + $0xe0] sm:$0xff] %v3187
  %3394 = vst [vmem:[%s4 + $0xe8] sm:$0xff] %v3192
  %3395 = vst [vmem:[%s4 + $0xf0] sm:$0xff] %v3197
  %3396 = vst [vmem:[%s4 + $0xf8] sm:$0xff] %v3202
  %3397 = vst [vmem:[%s4 + $0x100] sm:$0xff] %v3207
  %3398 = vst [vmem:[%s4 + $0x108] sm:$0xff] %v3212
  %3399 = vst [vmem:[%s4 + $0x110] sm:$0xff] %v3217
  %3400 = vst [vmem:[%s4 + $0x118] sm:$0xff] %v3222
  %3401 = vst [vmem:[%s4 + $0x120] sm:$0xff] %v3227
  %3402 = vst [vmem:[%s4 + $0x128] sm:$0xff] %v3232
  %3403 = vst [vmem:[%s4 + $0x130] sm:$0xff] %v3237
  %3404 = vst [vmem:[%s4 + $0x138] sm:$0xff] %v3242
  %3405 = vst [vmem:[%s4 + $0x140] sm:$0xff] %v3247
  %3406 = vst [vmem:[%s4 + $0x148] sm:$0xff] %v3252
  %3407 = vst [vmem:[%s4 + $0x150] sm:$0xff] %v3257
  %3408 = vst [vmem:[%s4 + $0x158] sm:$0xff] %v3262
  %3409 = vst [vmem:[%s4 + $0x160] sm:$0xff] %v3267
  %3410 = vst [vmem:[%s4 + $0x168] sm:$0xff] %v3272
  %3411 = vst [vmem:[%s4 + $0x170] sm:$0xff] %v3277
  %3412 = vst [vmem:[%s4 + $0x178] sm:$0xff] %v3282
  %3413 = vst [vmem:[%s4 + $0x180] sm:$0xff] %v3287
  %3414 = vst [vmem:[%s4 + $0x188] sm:$0xff] %v3292
  %3415 = vst [vmem:[%s4 + $0x190] sm:$0xff] %v3297
  %3416 = vst [vmem:[%s4 + $0x198] sm:$0xff] %v3302
  %3417 = vst [vmem:[%s4 + $0x1a0] sm:$0xff] %v3307
  %3418 = vst [vmem:[%s4 + $0x1a8] sm:$0xff] %v3312
  %3419 = vst [vmem:[%s4 + $0x1b0] sm:$0xff] %v3317
  %3420 = vst [vmem:[%s4 + $0x1b8] sm:$0xff] %v3322
  %3421 = vst [vmem:[%s4 + $0x1c0] sm:$0xff] %v3327
  %3422 = vst [vmem:[%s4 + $0x1c8] sm:$0xff] %v3332
  %3423 = vst [vmem:[%s4 + $0x1d0] sm:$0xff] %v3337
  %3424 = vst [vmem:[%s4 + $0x1d8] sm:$0xff] %v3342
  %3425 = vst [vmem:[%s4 + $0x1e0] sm:$0xff] %v3347
  %3426 = vst [vmem:[%s4 + $0x1e8] sm:$0xff] %v3352
  %3427 = vst [vmem:[%s4 + $0x1f0] sm:$0xff] %v3357
  %3428 = vst [vmem:[%s4 + $0x1f8] sm:$0xff] %v3362
  // Predicated region
  $region18: #{last_conv_dwsc.1} parent=0 // pred_check
    _
  $region19: #{last_conv_dwsc.1} parent=0 // pred_check_branch
    %3430 = sbr.rel (0) target = $region21
  $region20: #{last_conv_dwsc.1} parent=0 // pred_region
    _
  $region21: #{last_conv_dwsc.1} parent=0 // pred_fallthru
    _
  // Predicated region
  $region22: #{last_conv_dwsc.1} parent=0 // pred_check
    _
  $region23: #{last_conv_dwsc.1} parent=0 // pred_check_branch
    %3432 = sbr.rel (0) target = $region25
  $region24: #{last_conv_dwsc.1} parent=0 // pred_region
    _
  $region25: #{last_conv_dwsc.1} parent=0 // pred_fallthru
    _

</llo_original>
